<compile_context>
chip_gen: v5e
topology: v5e:2x2
jax: 0.10.0
libtpu: 0.0.40
codegen_flags: <defaults>
</compile_context>

<pallas_src>
import functools
import math

import jax
import jax.numpy as jnp
from jax import lax
from jax.experimental import pallas as pl
from jax.experimental.pallas import tpu as pltpu


def encoder_block_kernel(xs_ref,
                         wq_ref, bq_ref, wk_ref, bk_ref, wv_ref, bv_ref,
                         wo_ref, bo_ref,
                         w1_ref, b1_ref, w2_ref, b2_ref,
                         g1_ref, be1_ref, g2_ref, be2_ref,
                         o_ref,
                         k_cache, v_cache, vals_ref,
                         *, num_heads, head_dim, q_block, approx_recip):
    eps = 1e-5                                    # PyTorch LayerNorm default
    qi = pl.program_id(1)

    # ---- K / V projection: once per batch element (qi == 0), cached in VMEM ----
    @pl.when(qi == 0)
    def _():
        xs = xs_ref[...].astype(jnp.bfloat16)     # (S, D) full sequence, resident per b
        k_cache[...] = (jnp.dot(xs, wk_ref[...], preferred_element_type=jnp.float32)
                        + bk_ref[...]).astype(jnp.bfloat16)
        v_cache[...] = (jnp.dot(xs, wv_ref[...], preferred_element_type=jnp.float32)
                        + bv_ref[...]).astype(jnp.bfloat16)

    # ---- Query tile: sliced from the resident full-sequence block (x streamed once) ----
    row0 = pl.multiple_of(qi * q_block, q_block)
    x_res = xs_ref[pl.ds(row0, q_block), :].astype(jnp.float32)   # residual path in f32
    xq = x_res.astype(jnp.bfloat16)

    # Q projection (1/sqrt(head_dim) already folded into wq / bq by the wrapper).
    q = (jnp.dot(xq, wq_ref[...], preferred_element_type=jnp.float32)
         + bq_ref[...]).astype(jnp.bfloat16)                      # (TQ, D)
    k = k_cache[...]                                              # (S, D) bf16
    v = v_cache[...]                                              # (S, D) bf16

    # ---- Per-head attention; normalization deferred past the PV matmul ----
    for h in range(num_heads):
        s0 = h * head_dim
        q_h = q[:, s0:s0 + head_dim]
        k_h = k[:, s0:s0 + head_dim]
        v_h = v[:, s0:s0 + head_dim]
        # q @ k^T without materializing a transpose: contract the last dims.
        logits = lax.dot_general(q_h, k_h, (((1,), (1,)), ((), ())),
                                 preferred_element_type=jnp.float32)   # (TQ, S)
        m = jnp.max(logits, axis=-1, keepdims=True)
        p = jnp.exp(logits - m)                                        # unnormalized probs
        denom = jnp.sum(p, axis=-1, keepdims=True)
        inv = pl.reciprocal(denom, approx=True) if approx_recip else 1.0 / denom
        head_v = jnp.dot(p.astype(jnp.bfloat16), v_h,
                         preferred_element_type=jnp.float32)           # (TQ, hd)
        # Scale the head_dim-wide result (S/hd fewer VPU ops than scaling p) and drop
        # it into the fused-values buffer at this head's lane slice.
        vals_ref[:, s0:s0 + head_dim] = (head_v * inv).astype(jnp.bfloat16)

    # ---- Single full-depth output projection ----
    attn_out = (jnp.dot(vals_ref[...], wo_ref[...],
                        preferred_element_type=jnp.float32) + bo_ref[...])

    # ---- Residual + LayerNorm 1 (f32 statistics) ----
    x1 = x_res + attn_out
    mu1 = jnp.mean(x1, axis=-1, keepdims=True)
    var1 = jnp.mean(jnp.square(x1 - mu1), axis=-1, keepdims=True)
    x1n = (x1 - mu1) * lax.rsqrt(var1 + eps) * g1_ref[...] + be1_ref[...]

    # ---- Feed-forward network (bf16 MXU, f32 accumulation) ----
    h1 = jnp.dot(x1n.astype(jnp.bfloat16), w1_ref[...],
                 preferred_element_type=jnp.float32) + b1_ref[...]
    h1 = jnp.maximum(h1, 0.0).astype(jnp.bfloat16)                 # ReLU
    ffn = jnp.dot(h1, w2_ref[...], preferred_element_type=jnp.float32) + b2_ref[...]

    # ---- Residual + LayerNorm 2 ----
    x2 = x1n + ffn
    mu2 = jnp.mean(x2, axis=-1, keepdims=True)
    var2 = jnp.mean(jnp.square(x2 - mu2), axis=-1, keepdims=True)
    out = (x2 - mu2) * lax.rsqrt(var2 + eps) * g2_ref[...] + be2_ref[...]

    o_ref[...] = out.astype(o_ref.dtype)


def _const_spec(shape):
    """Full-array weight/bias block with a constant block index.

    Constant-index blocks are fetched once; request single buffering so resident
    weights don't also reserve a second (never-used) VMEM pipeline buffer.
    """
    idx = lambda b, qi: (0,) * len(shape)
    try:
        return pl.BlockSpec(shape, idx, pipeline_mode=pl.Buffered(1))
    except (TypeError, AttributeError):   # jax version without BlockSpec.pipeline_mode
        return pl.BlockSpec(shape, idx)


def _vmem_limit_bytes(S, D, F, q_block, act_itemsize):
    """Scoped-VMEM budget derived from actual buffer sizes, capped by physical VMEM."""
    bf16, f32 = 2, 4
    weights = (4 * D * D + 2 * D * F) * bf16                 # single-buffered bf16 weights
    small = (9 * D + F) * f32                                # biases + LayerNorm params
    x_stream = 2 * S * D * act_itemsize                      # double-buffered full-seq x
    out_stream = 2 * q_block * D * act_itemsize              # double-buffered output tile
    scratch = (2 * S * D + q_block * D) * bf16               # K/V caches + fused values
    work = (3 * q_block * S + q_block * (6 * D + 2 * F)) * f32   # logits / LN / FFN temps
    budget = weights + small + x_stream + out_stream + scratch + work
    try:
        cap = pltpu.get_tpu_info().vmem_capacity_bytes       # 128 MiB v5e/v6e, 64 MiB v7x
    except Exception:
        cap = 64 * 1024 * 1024                               # conservative (v7x) fallback
    return int(min(0.9 * cap, max(32 * 1024 * 1024, 1.25 * budget)))


def encoder_block(x, prep, num_heads, *, q_block=None, approx_recip=True):
    B, S, D = x.shape
    F = prep["w1"].shape[1]
    assert D % num_heads == 0
    head_dim = D // num_heads

    # Query tile (rows per grid step).  Larger tiles amortize the per-grid-step
    # overhead; smaller ones bound the (TQ, S) logits and feed more grid steps.
    if q_block is None:
        q_block = S if S <= 512 else 512
    # TODO(synk): no masked/ragged tail path — S must be a multiple of the query tile.
    assert S % q_block == 0, "sequence length must be a multiple of the query tile"
    # v7x megacore: keep a few parallel-ish grid steps when possible (8-aligned tiles).
    while (B * (S // q_block) < 4 and q_block % 2 == 0 and q_block // 2 >= 8
           and (q_block // 2) % 8 == 0 and S % (q_block // 2) == 0):
        q_block //= 2
    nq = S // q_block

    kernel = functools.partial(encoder_block_kernel,
                               num_heads=num_heads, head_dim=head_dim,
                               q_block=q_block, approx_recip=approx_recip)

    in_specs = [
        pl.BlockSpec((None, S, D), lambda b, qi: (b, 0, 0)),   # x: full sequence per batch
        _const_spec((D, D)), _const_spec((1, D)),              # Wq (scaled), bq
        _const_spec((D, D)), _const_spec((1, D)),              # Wk, bk
        _const_spec((D, D)), _const_spec((1, D)),              # Wv, bv
        _const_spec((D, D)), _const_spec((1, D)),              # Wo, bo
        _const_spec((D, F)), _const_spec((1, F)),              # W1, b1
        _const_spec((F, D)), _const_spec((1, D)),              # W2, b2
        _const_spec((1, D)), _const_spec((1, D)),              # norm1 gamma/beta
        _const_spec((1, D)), _const_spec((1, D)),              # norm2 gamma/beta
    ]

    scratch_shapes = [
        pltpu.VMEM((S, D), jnp.bfloat16),          # K cache (rebuilt when qi == 0)
        pltpu.VMEM((S, D), jnp.bfloat16),          # V cache
        pltpu.VMEM((q_block, D), jnp.bfloat16),    # fused per-head values buffer
    ]

    # Advisory cost estimate (K/V projection counted once per batch element).
    flops = int(B * (8 * S * D * D + 4 * S * S * D + 4 * S * D * F))
    transcendentals = int(B * num_heads * S * S)
    weight_bytes = sum(int(v.size * v.dtype.itemsize) for v in prep.values())
    bytes_accessed = int(2 * x.size * x.dtype.itemsize + weight_bytes)

    return pl.pallas_call(
        kernel,
        out_shape=jax.ShapeDtypeStruct((B, S, D), x.dtype),
        grid=(B, nq),
        in_specs=in_specs,
        out_specs=pl.BlockSpec((None, q_block, D), lambda b, qi: (b, qi, 0)),
        scratch_shapes=scratch_shapes,
        compiler_params=pltpu.CompilerParams(
            # b is independent (megacore-shardable); qi must run in order because the
            # K/V VMEM cache is (re)built at qi == 0 for each batch element.
            dimension_semantics=("parallel", "arbitrary"),
            vmem_limit_bytes=_vmem_limit_bytes(S, D, F, q_block, x.dtype.itemsize)),
        cost_estimate=pl.CostEstimate(flops=flops,
                                      transcendentals=transcendentals,
                                      bytes_accessed=bytes_accessed),
    )(x,
      prep["wq"], prep["bq"], prep["wk"], prep["bk"], prep["wv"], prep["bv"],
      prep["wo"], prep["bo"],
      prep["w1"], prep["b1"], prep["w2"], prep["b2"],
      prep["g1"], prep["be1"], prep["g2"], prep["be2"])


def prepare_params(params, num_heads):
    """Convert module-layout f32 params into the kernel layout (done once, offline).

    - Splits the interleaved per-head [q|k|v] columns of wqkv (the layout implied by
      the PyTorch module's reshape/permute) into contiguous Wq / Wk / Wv.
    - Folds the 1/sqrt(head_dim) attention scale into Wq / bq (free).
    - Stores matmul weights in bf16 (MXU native); biases and LayerNorm params stay f32.
    """
    D = params["wqkv"].shape[0]
    hd = D // num_heads
    scale = 1.0 / math.sqrt(hd)

    w = params["wqkv"].reshape(D, num_heads, 3, hd)
    b = params["bqkv"].reshape(num_heads, 3, hd)
    return {
        "wq": (w[:, :, 0, :].reshape(D, D) * scale).astype(jnp.bfloat16),
        "bq": (b[:, 0, :].reshape(1, D) * scale).astype(jnp.float32),
        "wk": w[:, :, 1, :].reshape(D, D).astype(jnp.bfloat16),
        "bk": b[:, 1, :].reshape(1, D).astype(jnp.float32),
        "wv": w[:, :, 2, :].reshape(D, D).astype(jnp.bfloat16),
        "bv": b[:, 2, :].reshape(1, D).astype(jnp.float32),
        "wo": params["wo"].astype(jnp.bfloat16), "bo": params["bo"],
        "w1": params["w1"].astype(jnp.bfloat16), "b1": params["b1"],
        "w2": params["w2"].astype(jnp.bfloat16), "b2": params["b2"],
        "g1": params["g1"], "be1": params["be1"],
        "g2": params["g2"], "be2": params["be2"],
    }


def init_params(key, input_dim, num_heads, dim_feedforward):
    """Deterministic f32 params mirroring the PyTorch module's shapes / init.

    qkv_proj / o_proj: xavier_uniform weights, zero bias (as in _reset_parameters).
    linear_net layers: torch-style uniform init; LayerNorm: gamma=1, beta=0.
    Weights are stored (in, out) so kernels compute x @ W.
    """
    D, Fd = input_dim, dim_feedforward
    k1, k2, k3, k4, k5, k6 = jax.random.split(key, 6)

    def xavier(k, fan_in, fan_out):
        bound = math.sqrt(6.0 / (fan_in + fan_out))
        return jax.random.uniform(k, (fan_in, fan_out), jnp.float32, -bound, bound)

    def torch_linear_w(k, fan_in, fan_out):
        bound = 1.0 / math.sqrt(fan_in)
        return jax.random.uniform(k, (fan_in, fan_out), jnp.float32, -bound, bound)

    def torch_linear_b(k, fan_in, fan_out):
        bound = 1.0 / math.sqrt(fan_in)
        return jax.random.uniform(k, (1, fan_out), jnp.float32, -bound, bound)

    return {
        "wqkv": xavier(k1, D, 3 * D),
        "bqkv": jnp.zeros((1, 3 * D), jnp.float32),
        "wo":   xavier(k2, D, D),
        "bo":   jnp.zeros((1, D), jnp.float32),
        "w1":   torch_linear_w(k3, D, Fd),
        "b1":   torch_linear_b(k5, D, Fd),
        "w2":   torch_linear_w(k4, Fd, D),
        "b2":   torch_linear_b(k6, Fd, D),
        "g1":   jnp.ones((1, D), jnp.float32),
        "be1":  jnp.zeros((1, D), jnp.float32),
        "g2":   jnp.ones((1, D), jnp.float32),
        "be2":  jnp.zeros((1, D), jnp.float32),
    }


def encoder_block_ref(x, p, num_heads):
    """Pure-JAX f32 reference (interleaved qkv layout, exactly like the PyTorch module)."""
    B, S, D = x.shape
    hd = D // num_heads
    qkv = x @ p["wqkv"] + p["bqkv"][0]
    qkv = qkv.reshape(B, S, num_heads, 3 * hd).transpose(0, 2, 1, 3)
    q, k, v = jnp.split(qkv, 3, axis=-1)
    logits = jnp.einsum("bhqd,bhkd->bhqk", q, k) / math.sqrt(hd)
    attn = jax.nn.softmax(logits, axis=-1)
    vals = jnp.einsum("bhqk,bhkd->bhqd", attn, v)
    vals = vals.transpose(0, 2, 1, 3).reshape(B, S, D)
    o = vals @ p["wo"] + p["bo"][0]

    def ln(z, g, b):
        mu = z.mean(-1, keepdims=True)
        var = ((z - mu) ** 2).mean(-1, keepdims=True)
        return (z - mu) * lax.rsqrt(var + 1e-5) * g[0] + b[0]

    x1 = ln(x + o, p["g1"], p["be1"])
    ffn = jnp.maximum(x1 @ p["w1"] + p["b1"][0], 0.0) @ p["w2"] + p["b2"][0]
    return ln(x1 + ffn, p["g2"], p["be2"])


if __name__ == "__main__":
    # Small shapes implied by the module: (batch, seq, input_dim)
    B, S, D = 2, 8, 32
    num_heads = 4
    dim_feedforward = 64

    key = jax.random.PRNGKey(0)
    kx, kp = jax.random.split(key)
    x = jax.random.normal(kx, (B, S, D), jnp.float32)
    params = init_params(kp, D, num_heads, dim_feedforward)
    prep = prepare_params(params, num_heads)

    out = jax.block_until_ready(encoder_block(x, prep, num_heads))
    ref = encoder_block_ref(x, params, num_heads)

    assert out.shape == (B, S, D)
    # bf16 MXU matmuls + approx reciprocal (flagged via approx_recip) vs the f32
    # reference: outputs are LayerNorm-ed (unit scale), so a few 1e-2 of slack covers
    # the precision gap.
    assert jnp.allclose(out, ref, atol=5e-2, rtol=5e-2), (
        f"mismatch vs JAX reference, max abs diff {jnp.max(jnp.abs(out - ref))}")
    print("KERNEL_OK")
</pallas_src>

<mosaic_0001>
module attributes {stable_mosaic.version = 11 : i64} {
  func.func @encoder_block_kernel(%arg0: i32, %arg1: i32, %arg2: memref<1x8x32xf32, #tpu.memory_space<vmem>>, %arg3: memref<32x32xbf16, #tpu.memory_space<vmem>>, %arg4: memref<1x32xf32, #tpu.memory_space<vmem>>, %arg5: memref<32x32xbf16, #tpu.memory_space<vmem>>, %arg6: memref<1x32xf32, #tpu.memory_space<vmem>>, %arg7: memref<32x32xbf16, #tpu.memory_space<vmem>>, %arg8: memref<1x32xf32, #tpu.memory_space<vmem>>, %arg9: memref<32x32xbf16, #tpu.memory_space<vmem>>, %arg10: memref<1x32xf32, #tpu.memory_space<vmem>>, %arg11: memref<32x64xbf16, #tpu.memory_space<vmem>>, %arg12: memref<1x64xf32, #tpu.memory_space<vmem>>, %arg13: memref<64x32xbf16, #tpu.memory_space<vmem>>, %arg14: memref<1x32xf32, #tpu.memory_space<vmem>>, %arg15: memref<1x32xf32, #tpu.memory_space<vmem>>, %arg16: memref<1x32xf32, #tpu.memory_space<vmem>>, %arg17: memref<1x32xf32, #tpu.memory_space<vmem>>, %arg18: memref<1x32xf32, #tpu.memory_space<vmem>>, %arg19: memref<1x8x32xf32, #tpu.memory_space<vmem>>, %arg20: memref<8x32xbf16, #tpu.memory_space<vmem>>, %arg21: memref<8x32xbf16, #tpu.memory_space<vmem>>, %arg22: memref<8x32xbf16, #tpu.memory_space<vmem>>) attributes {dimension_semantics = [#tpu.dimension_semantics<parallel>, #tpu.dimension_semantics<arbitrary>], iteration_bounds = array<i64: 2, 1>, scalar_prefetch = 0 : i64, scratch_operands = 3 : i64, tpu.core_type = #tpu.core_type<tc>, window_params = [{transform_indices = @transform_0, window_bounds = array<i64: 1, 8, 32>}, {pipeline_mode = #tpu.pipeline_mode<synchronous>, transform_indices = @transform_1, window_bounds = array<i64: 32, 32>}, {pipeline_mode = #tpu.pipeline_mode<synchronous>, transform_indices = @transform_2, window_bounds = array<i64: 1, 32>}, {pipeline_mode = #tpu.pipeline_mode<synchronous>, transform_indices = @transform_3, window_bounds = array<i64: 32, 32>}, {pipeline_mode = #tpu.pipeline_mode<synchronous>, transform_indices = @transform_4, window_bounds = array<i64: 1, 32>}, {pipeline_mode = #tpu.pipeline_mode<synchronous>, transform_indices = @transform_5, window_bounds = array<i64: 32, 32>}, {pipeline_mode = #tpu.pipeline_mode<synchronous>, transform_indices = @transform_6, window_bounds = array<i64: 1, 32>}, {pipeline_mode = #tpu.pipeline_mode<synchronous>, transform_indices = @transform_7, window_bounds = array<i64: 32, 32>}, {pipeline_mode = #tpu.pipeline_mode<synchronous>, transform_indices = @transform_8, window_bounds = array<i64: 1, 32>}, {pipeline_mode = #tpu.pipeline_mode<synchronous>, transform_indices = @transform_9, window_bounds = array<i64: 32, 64>}, {pipeline_mode = #tpu.pipeline_mode<synchronous>, transform_indices = @transform_10, window_bounds = array<i64: 1, 64>}, {pipeline_mode = #tpu.pipeline_mode<synchronous>, transform_indices = @transform_11, window_bounds = array<i64: 64, 32>}, {pipeline_mode = #tpu.pipeline_mode<synchronous>, transform_indices = @transform_12, window_bounds = array<i64: 1, 32>}, {pipeline_mode = #tpu.pipeline_mode<synchronous>, transform_indices = @transform_13, window_bounds = array<i64: 1, 32>}, {pipeline_mode = #tpu.pipeline_mode<synchronous>, transform_indices = @transform_14, window_bounds = array<i64: 1, 32>}, {pipeline_mode = #tpu.pipeline_mode<synchronous>, transform_indices = @transform_15, window_bounds = array<i64: 1, 32>}, {pipeline_mode = #tpu.pipeline_mode<synchronous>, transform_indices = @transform_16, window_bounds = array<i64: 1, 32>}, {transform_indices = @transform_17, window_bounds = array<i64: 1, 8, 32>}]} {
    %c0_i32 = arith.constant 0 : i32
    %0 = arith.cmpi eq, %arg1, %c0_i32 : i32
    %1 = arith.extui %0 : i1 to i32
    %c0_i32_0 = arith.constant 0 : i32
    %2 = arith.cmpi ne, %1, %c0_i32_0 : i32
    scf.if %2 {
      %c0_70 = arith.constant 0 : index
      %c0_71 = arith.constant 0 : index
      %c0_72 = arith.constant 0 : index
      %162 = vector.load %arg2[%c0_70, %c0_71, %c0_72] : memref<1x8x32xf32, #tpu.memory_space<vmem>>, vector<1x8x32xf32>
      %163 = vector.shape_cast %162 : vector<1x8x32xf32> to vector<8x32xf32>
      %164 = arith.truncf %163 : vector<8x32xf32> to vector<8x32xbf16>
      %c0_73 = arith.constant 0 : index
      %c0_74 = arith.constant 0 : index
      %165 = vector.load %arg5[%c0_73, %c0_74] : memref<32x32xbf16, #tpu.memory_space<vmem>>, vector<32x32xbf16>
      %cst_75 = arith.constant dense<0.000000e+00> : vector<8x32xf32>
      %166 = tpu.matmul %164, %165, %cst_75 {dimension_numbers = #tpu.dot_dimension_numbers<[1], [0], [0], [1], [0, 0, 1, 1], [], []>} : vector<8x32xbf16>, vector<32x32xbf16>, vector<8x32xf32> -> vector<8x32xf32>
      %c0_76 = arith.constant 0 : index
      %c0_77 = arith.constant 0 : index
      %167 = vector.load %arg6[%c0_76, %c0_77] : memref<1x32xf32, #tpu.memory_space<vmem>>, vector<1x32xf32>
      %168 = vector.broadcast %167 : vector<1x32xf32> to vector<8x32xf32>
      %169 = arith.addf %166, %168 : vector<8x32xf32>
      %170 = arith.truncf %169 : vector<8x32xf32> to vector<8x32xbf16>
      %c0_78 = arith.constant 0 : index
      %c0_79 = arith.constant 0 : index
      %171 = vector.load %arg20[%c0_78, %c0_79] : memref<8x32xbf16, #tpu.memory_space<vmem>>, vector<8x32xbf16>
      tpu.vector_store %arg20[%c0_78, %c0_79], %170 {strides = array<i32>} : memref<8x32xbf16, #tpu.memory_space<vmem>>, vector<8x32xbf16>,
      %c0_80 = arith.constant 0 : index
      %c0_81 = arith.constant 0 : index
      %172 = vector.load %arg7[%c0_80, %c0_81] : memref<32x32xbf16, #tpu.memory_space<vmem>>, vector<32x32xbf16>
      %cst_82 = arith.constant dense<0.000000e+00> : vector<8x32xf32>
      %173 = tpu.matmul %164, %172, %cst_82 {dimension_numbers = #tpu.dot_dimension_numbers<[1], [0], [0], [1], [0, 0, 1, 1], [], []>} : vector<8x32xbf16>, vector<32x32xbf16>, vector<8x32xf32> -> vector<8x32xf32>
      %c0_83 = arith.constant 0 : index
      %c0_84 = arith.constant 0 : index
      %174 = vector.load %arg8[%c0_83, %c0_84] : memref<1x32xf32, #tpu.memory_space<vmem>>, vector<1x32xf32>
      %175 = vector.broadcast %174 : vector<1x32xf32> to vector<8x32xf32>
      %176 = arith.addf %173, %175 : vector<8x32xf32>
      %177 = arith.truncf %176 : vector<8x32xf32> to vector<8x32xbf16>
      %c0_85 = arith.constant 0 : index
      %c0_86 = arith.constant 0 : index
      %178 = vector.load %arg21[%c0_85, %c0_86] : memref<8x32xbf16, #tpu.memory_space<vmem>>, vector<8x32xbf16>
      tpu.vector_store %arg21[%c0_85, %c0_86], %177 {strides = array<i32>} : memref<8x32xbf16, #tpu.memory_space<vmem>>, vector<8x32xbf16>,
    } else {
    }
    %c8_i32 = arith.constant 8 : i32
    %3 = arith.muli %arg1, %c8_i32 : i32
    %4 = tpu.assume_multiple %3, 8 : i32
    %c0 = arith.constant 0 : index
    %5 = arith.index_cast %4 : i32 to index
    %c0_1 = arith.constant 0 : index
    %6 = vector.load %arg2[%c0, %5, %c0_1] : memref<1x8x32xf32, #tpu.memory_space<vmem>>, vector<1x8x32xf32>
    %7 = vector.shape_cast %6 : vector<1x8x32xf32> to vector<8x32xf32>
    %8 = arith.truncf %7 : vector<8x32xf32> to vector<8x32xbf16>
    %c0_2 = arith.constant 0 : index
    %c0_3 = arith.constant 0 : index
    %9 = vector.load %arg3[%c0_2, %c0_3] : memref<32x32xbf16, #tpu.memory_space<vmem>>, vector<32x32xbf16>
    %cst = arith.constant dense<0.000000e+00> : vector<8x32xf32>
    %10 = tpu.matmul %8, %9, %cst {dimension_numbers = #tpu.dot_dimension_numbers<[1], [0], [0], [1], [0, 0, 1, 1], [], []>} : vector<8x32xbf16>, vector<32x32xbf16>, vector<8x32xf32> -> vector<8x32xf32>
    %c0_4 = arith.constant 0 : index
    %c0_5 = arith.constant 0 : index
    %11 = vector.load %arg4[%c0_4, %c0_5] : memref<1x32xf32, #tpu.memory_space<vmem>>, vector<1x32xf32>
    %12 = vector.broadcast %11 : vector<1x32xf32> to vector<8x32xf32>
    %13 = arith.addf %10, %12 : vector<8x32xf32>
    %14 = arith.truncf %13 : vector<8x32xf32> to vector<8x32xbf16>
    %c0_6 = arith.constant 0 : index
    %c0_7 = arith.constant 0 : index
    %15 = vector.load %arg20[%c0_6, %c0_7] : memref<8x32xbf16, #tpu.memory_space<vmem>>, vector<8x32xbf16>
    %c0_8 = arith.constant 0 : index
    %c0_9 = arith.constant 0 : index
    %16 = vector.load %arg21[%c0_8, %c0_9] : memref<8x32xbf16, #tpu.memory_space<vmem>>, vector<8x32xbf16>
    %17 = vector.extract_strided_slice %14 {offsets = [0, 0], sizes = [8, 8], strides = [1, 1]} : vector<8x32xbf16> to vector<8x8xbf16>
    %18 = vector.extract_strided_slice %15 {offsets = [0, 0], sizes = [8, 8], strides = [1, 1]} : vector<8x32xbf16> to vector<8x8xbf16>
    %19 = vector.extract_strided_slice %16 {offsets = [0, 0], sizes = [8, 8], strides = [1, 1]} : vector<8x32xbf16> to vector<8x8xbf16>
    %cst_10 = arith.constant dense<0.000000e+00> : vector<8x8xf32>
    %20 = tpu.matmul %17, %18, %cst_10 {dimension_numbers = #tpu.dot_dimension_numbers<[1], [1], [0], [0], [0, 0, 1, 0], [], []>} : vector<8x8xbf16>, vector<8x8xbf16>, vector<8x8xf32> -> vector<8x8xf32>
    %cst_11 = arith.constant dense<0xFF800000> : vector<8xf32>
    %21 = vector.multi_reduction <maximumf>, %20, %cst_11 [1] : vector<8x8xf32> to vector<8xf32>
    %22 = vector.shape_cast %21 : vector<8xf32> to vector<8x1xf32>
    %23 = vector.broadcast %22 : vector<8x1xf32> to vector<8x8xf32>
    %24 = arith.subf %20, %23 : vector<8x8xf32>
    %25 = math.exp %24 : vector<8x8xf32>
    %cst_12 = arith.constant dense<0.000000e+00> : vector<8xf32>
    %26 = vector.multi_reduction <add>, %25, %cst_12 [1] : vector<8x8xf32> to vector<8xf32>
    %27 = vector.shape_cast %26 : vector<8xf32> to vector<8x1xf32>
    %28 = tpu.reciprocal %27 {approx = true} : vector<8x1xf32> -> vector<8x1xf32>
    %29 = arith.truncf %25 : vector<8x8xf32> to vector<8x8xbf16>
    %cst_13 = arith.constant dense<0.000000e+00> : vector<8x8xf32>
    %30 = tpu.matmul %29, %19, %cst_13 {dimension_numbers = #tpu.dot_dimension_numbers<[1], [0], [0], [1], [0, 0, 1, 1], [], []>} : vector<8x8xbf16>, vector<8x8xbf16>, vector<8x8xf32> -> vector<8x8xf32>
    %31 = vector.broadcast %28 : vector<8x1xf32> to vector<8x8xf32>
    %32 = arith.mulf %30, %31 : vector<8x8xf32>
    %33 = arith.truncf %32 : vector<8x8xf32> to vector<8x8xbf16>
    %c0_14 = arith.constant 0 : index
    %c0_15 = arith.constant 0 : index
    %34 = vector.load %arg22[%c0_14, %c0_15] : memref<8x32xbf16, #tpu.memory_space<vmem>>, vector<8x8xbf16>
    tpu.vector_store %arg22[%c0_14, %c0_15], %33 {strides = array<i32>} : memref<8x32xbf16, #tpu.memory_space<vmem>>, vector<8x8xbf16>,
    %35 = vector.extract_strided_slice %14 {offsets = [0, 8], sizes = [8, 8], strides = [1, 1]} : vector<8x32xbf16> to vector<8x8xbf16>
    %36 = vector.extract_strided_slice %15 {offsets = [0, 8], sizes = [8, 8], strides = [1, 1]} : vector<8x32xbf16> to vector<8x8xbf16>
    %37 = vector.extract_strided_slice %16 {offsets = [0, 8], sizes = [8, 8], strides = [1, 1]} : vector<8x32xbf16> to vector<8x8xbf16>
    %cst_16 = arith.constant dense<0.000000e+00> : vector<8x8xf32>
    %38 = tpu.matmul %35, %36, %cst_16 {dimension_numbers = #tpu.dot_dimension_numbers<[1], [1], [0], [0], [0, 0, 1, 0], [], []>} : vector<8x8xbf16>, vector<8x8xbf16>, vector<8x8xf32> -> vector<8x8xf32>
    %cst_17 = arith.constant dense<0xFF800000> : vector<8xf32>
    %39 = vector.multi_reduction <maximumf>, %38, %cst_17 [1] : vector<8x8xf32> to vector<8xf32>
    %40 = vector.shape_cast %39 : vector<8xf32> to vector<8x1xf32>
    %41 = vector.broadcast %40 : vector<8x1xf32> to vector<8x8xf32>
    %42 = arith.subf %38, %41 : vector<8x8xf32>
    %43 = math.exp %42 : vector<8x8xf32>
    %cst_18 = arith.constant dense<0.000000e+00> : vector<8xf32>
    %44 = vector.multi_reduction <add>, %43, %cst_18 [1] : vector<8x8xf32> to vector<8xf32>
    %45 = vector.shape_cast %44 : vector<8xf32> to vector<8x1xf32>
    %46 = tpu.reciprocal %45 {approx = true} : vector<8x1xf32> -> vector<8x1xf32>
    %47 = arith.truncf %43 : vector<8x8xf32> to vector<8x8xbf16>
    %cst_19 = arith.constant dense<0.000000e+00> : vector<8x8xf32>
    %48 = tpu.matmul %47, %37, %cst_19 {dimension_numbers = #tpu.dot_dimension_numbers<[1], [0], [0], [1], [0, 0, 1, 1], [], []>} : vector<8x8xbf16>, vector<8x8xbf16>, vector<8x8xf32> -> vector<8x8xf32>
    %49 = vector.broadcast %46 : vector<8x1xf32> to vector<8x8xf32>
    %50 = arith.mulf %48, %49 : vector<8x8xf32>
    %51 = arith.truncf %50 : vector<8x8xf32> to vector<8x8xbf16>
    %c0_20 = arith.constant 0 : index
    %c8 = arith.constant 8 : index
    %52 = vector.load %arg22[%c0_20, %c8] : memref<8x32xbf16, #tpu.memory_space<vmem>>, vector<8x8xbf16>
    tpu.vector_store %arg22[%c0_20, %c8], %51 {strides = array<i32>} : memref<8x32xbf16, #tpu.memory_space<vmem>>, vector<8x8xbf16>,
    %53 = vector.extract_strided_slice %14 {offsets = [0, 16], sizes = [8, 8], strides = [1, 1]} : vector<8x32xbf16> to vector<8x8xbf16>
    %54 = vector.extract_strided_slice %15 {offsets = [0, 16], sizes = [8, 8], strides = [1, 1]} : vector<8x32xbf16> to vector<8x8xbf16>
    %55 = vector.extract_strided_slice %16 {offsets = [0, 16], sizes = [8, 8], strides = [1, 1]} : vector<8x32xbf16> to vector<8x8xbf16>
    %cst_21 = arith.constant dense<0.000000e+00> : vector<8x8xf32>
    %56 = tpu.matmul %53, %54, %cst_21 {dimension_numbers = #tpu.dot_dimension_numbers<[1], [1], [0], [0], [0, 0, 1, 0], [], []>} : vector<8x8xbf16>, vector<8x8xbf16>, vector<8x8xf32> -> vector<8x8xf32>
    %cst_22 = arith.constant dense<0xFF800000> : vector<8xf32>
    %57 = vector.multi_reduction <maximumf>, %56, %cst_22 [1] : vector<8x8xf32> to vector<8xf32>
    %58 = vector.shape_cast %57 : vector<8xf32> to vector<8x1xf32>
    %59 = vector.broadcast %58 : vector<8x1xf32> to vector<8x8xf32>
    %60 = arith.subf %56, %59 : vector<8x8xf32>
    %61 = math.exp %60 : vector<8x8xf32>
    %cst_23 = arith.constant dense<0.000000e+00> : vector<8xf32>
    %62 = vector.multi_reduction <add>, %61, %cst_23 [1] : vector<8x8xf32> to vector<8xf32>
    %63 = vector.shape_cast %62 : vector<8xf32> to vector<8x1xf32>
    %64 = tpu.reciprocal %63 {approx = true} : vector<8x1xf32> -> vector<8x1xf32>
    %65 = arith.truncf %61 : vector<8x8xf32> to vector<8x8xbf16>
    %cst_24 = arith.constant dense<0.000000e+00> : vector<8x8xf32>
    %66 = tpu.matmul %65, %55, %cst_24 {dimension_numbers = #tpu.dot_dimension_numbers<[1], [0], [0], [1], [0, 0, 1, 1], [], []>} : vector<8x8xbf16>, vector<8x8xbf16>, vector<8x8xf32> -> vector<8x8xf32>
    %67 = vector.broadcast %64 : vector<8x1xf32> to vector<8x8xf32>
    %68 = arith.mulf %66, %67 : vector<8x8xf32>
    %69 = arith.truncf %68 : vector<8x8xf32> to vector<8x8xbf16>
    %c0_25 = arith.constant 0 : index
    %c16 = arith.constant 16 : index
    %70 = vector.load %arg22[%c0_25, %c16] : memref<8x32xbf16, #tpu.memory_space<vmem>>, vector<8x8xbf16>
    tpu.vector_store %arg22[%c0_25, %c16], %69 {strides = array<i32>} : memref<8x32xbf16, #tpu.memory_space<vmem>>, vector<8x8xbf16>,
    %71 = vector.extract_strided_slice %14 {offsets = [0, 24], sizes = [8, 8], strides = [1, 1]} : vector<8x32xbf16> to vector<8x8xbf16>
    %72 = vector.extract_strided_slice %15 {offsets = [0, 24], sizes = [8, 8], strides = [1, 1]} : vector<8x32xbf16> to vector<8x8xbf16>
    %73 = vector.extract_strided_slice %16 {offsets = [0, 24], sizes = [8, 8], strides = [1, 1]} : vector<8x32xbf16> to vector<8x8xbf16>
    %cst_26 = arith.constant dense<0.000000e+00> : vector<8x8xf32>
    %74 = tpu.matmul %71, %72, %cst_26 {dimension_numbers = #tpu.dot_dimension_numbers<[1], [1], [0], [0], [0, 0, 1, 0], [], []>} : vector<8x8xbf16>, vector<8x8xbf16>, vector<8x8xf32> -> vector<8x8xf32>
    %cst_27 = arith.constant dense<0xFF800000> : vector<8xf32>
    %75 = vector.multi_reduction <maximumf>, %74, %cst_27 [1] : vector<8x8xf32> to vector<8xf32>
    %76 = vector.shape_cast %75 : vector<8xf32> to vector<8x1xf32>
    %77 = vector.broadcast %76 : vector<8x1xf32> to vector<8x8xf32>
    %78 = arith.subf %74, %77 : vector<8x8xf32>
    %79 = math.exp %78 : vector<8x8xf32>
    %cst_28 = arith.constant dense<0.000000e+00> : vector<8xf32>
    %80 = vector.multi_reduction <add>, %79, %cst_28 [1] : vector<8x8xf32> to vector<8xf32>
    %81 = vector.shape_cast %80 : vector<8xf32> to vector<8x1xf32>
    %82 = tpu.reciprocal %81 {approx = true} : vector<8x1xf32> -> vector<8x1xf32>
    %83 = arith.truncf %79 : vector<8x8xf32> to vector<8x8xbf16>
    %cst_29 = arith.constant dense<0.000000e+00> : vector<8x8xf32>
    %84 = tpu.matmul %83, %73, %cst_29 {dimension_numbers = #tpu.dot_dimension_numbers<[1], [0], [0], [1], [0, 0, 1, 1], [], []>} : vector<8x8xbf16>, vector<8x8xbf16>, vector<8x8xf32> -> vector<8x8xf32>
    %85 = vector.broadcast %82 : vector<8x1xf32> to vector<8x8xf32>
    %86 = arith.mulf %84, %85 : vector<8x8xf32>
    %87 = arith.truncf %86 : vector<8x8xf32> to vector<8x8xbf16>
    %c0_30 = arith.constant 0 : index
    %c24 = arith.constant 24 : index
    %88 = vector.load %arg22[%c0_30, %c24] : memref<8x32xbf16, #tpu.memory_space<vmem>>, vector<8x8xbf16>
    tpu.vector_store %arg22[%c0_30, %c24], %87 {strides = array<i32>} : memref<8x32xbf16, #tpu.memory_space<vmem>>, vector<8x8xbf16>,
    %c0_31 = arith.constant 0 : index
    %c0_32 = arith.constant 0 : index
    %89 = vector.load %arg22[%c0_31, %c0_32] : memref<8x32xbf16, #tpu.memory_space<vmem>>, vector<8x32xbf16>
    %c0_33 = arith.constant 0 : index
    %c0_34 = arith.constant 0 : index
    %90 = vector.load %arg9[%c0_33, %c0_34] : memref<32x32xbf16, #tpu.memory_space<vmem>>, vector<32x32xbf16>
    %cst_35 = arith.constant dense<0.000000e+00> : vector<8x32xf32>
    %91 = tpu.matmul %89, %90, %cst_35 {dimension_numbers = #tpu.dot_dimension_numbers<[1], [0], [0], [1], [0, 0, 1, 1], [], []>} : vector<8x32xbf16>, vector<32x32xbf16>, vector<8x32xf32> -> vector<8x32xf32>
    %c0_36 = arith.constant 0 : index
    %c0_37 = arith.constant 0 : index
    %92 = vector.load %arg10[%c0_36, %c0_37] : memref<1x32xf32, #tpu.memory_space<vmem>>, vector<1x32xf32>
    %93 = vector.broadcast %92 : vector<1x32xf32> to vector<8x32xf32>
    %94 = arith.addf %91, %93 : vector<8x32xf32>
    %95 = arith.addf %7, %94 : vector<8x32xf32>
    %cst_38 = arith.constant dense<0.000000e+00> : vector<8xf32>
    %96 = vector.multi_reduction <add>, %95, %cst_38 [1] : vector<8x32xf32> to vector<8xf32>
    %97 = vector.shape_cast %96 : vector<8xf32> to vector<8x1xf32>
    %cst_39 = arith.constant 3.200000e+01 : f32
    %98 = vector.broadcast %cst_39 : f32 to vector<8x1xf32>
    %99 = arith.divf %97, %98 : vector<8x1xf32>
    %100 = vector.broadcast %99 : vector<8x1xf32> to vector<8x32xf32>
    %101 = arith.subf %95, %100 : vector<8x32xf32>
    %102 = arith.mulf %101, %101 : vector<8x32xf32>
    %cst_40 = arith.constant dense<0.000000e+00> : vector<8xf32>
    %103 = vector.multi_reduction <add>, %102, %cst_40 [1] : vector<8x32xf32> to vector<8xf32>
    %104 = vector.shape_cast %103 : vector<8xf32> to vector<8x1xf32>
    %cst_41 = arith.constant 3.200000e+01 : f32
    %105 = vector.broadcast %cst_41 : f32 to vector<8x1xf32>
    %106 = arith.divf %104, %105 : vector<8x1xf32>
    %107 = vector.broadcast %99 : vector<8x1xf32> to vector<8x32xf32>
    %108 = arith.subf %95, %107 : vector<8x32xf32>
    %cst_42 = arith.constant 9.99999974E-6 : f32
    %109 = vector.broadcast %cst_42 : f32 to vector<8x1xf32>
    %110 = arith.addf %106, %109 : vector<8x1xf32>
    %111 = math.rsqrt %110 : vector<8x1xf32>
    %112 = vector.broadcast %111 : vector<8x1xf32> to vector<8x32xf32>
    %113 = arith.mulf %108, %112 : vector<8x32xf32>
    %c0_43 = arith.constant 0 : index
    %c0_44 = arith.constant 0 : index
    %114 = vector.load %arg15[%c0_43, %c0_44] : memref<1x32xf32, #tpu.memory_space<vmem>>, vector<1x32xf32>
    %115 = vector.broadcast %114 : vector<1x32xf32> to vector<8x32xf32>
    %116 = arith.mulf %113, %115 : vector<8x32xf32>
    %c0_45 = arith.constant 0 : index
    %c0_46 = arith.constant 0 : index
    %117 = vector.load %arg16[%c0_45, %c0_46] : memref<1x32xf32, #tpu.memory_space<vmem>>, vector<1x32xf32>
    %118 = vector.broadcast %117 : vector<1x32xf32> to vector<8x32xf32>
    %119 = arith.addf %116, %118 : vector<8x32xf32>
    %120 = arith.truncf %119 : vector<8x32xf32> to vector<8x32xbf16>
    %c0_47 = arith.constant 0 : index
    %c0_48 = arith.constant 0 : index
    %121 = vector.load %arg11[%c0_47, %c0_48] : memref<32x64xbf16, #tpu.memory_space<vmem>>, vector<32x64xbf16>
    %cst_49 = arith.constant dense<0.000000e+00> : vector<8x64xf32>
    %122 = tpu.matmul %120, %121, %cst_49 {dimension_numbers = #tpu.dot_dimension_numbers<[1], [0], [0], [1], [0, 0, 1, 1], [], []>} : vector<8x32xbf16>, vector<32x64xbf16>, vector<8x64xf32> -> vector<8x64xf32>
    %c0_50 = arith.constant 0 : index
    %c0_51 = arith.constant 0 : index
    %123 = vector.load %arg12[%c0_50, %c0_51] : memref<1x64xf32, #tpu.memory_space<vmem>>, vector<1x64xf32>
    %124 = vector.broadcast %123 : vector<1x64xf32> to vector<8x64xf32>
    %125 = arith.addf %122, %124 : vector<8x64xf32>
    %cst_52 = arith.constant 0.000000e+00 : f32
    %126 = vector.broadcast %cst_52 : f32 to vector<8x64xf32>
    %127 = arith.maximumf %125, %126 : vector<8x64xf32>
    %128 = arith.truncf %127 : vector<8x64xf32> to vector<8x64xbf16>
    %c0_53 = arith.constant 0 : index
    %c0_54 = arith.constant 0 : index
    %129 = vector.load %arg13[%c0_53, %c0_54] : memref<64x32xbf16, #tpu.memory_space<vmem>>, vector<64x32xbf16>
    %cst_55 = arith.constant dense<0.000000e+00> : vector<8x32xf32>
    %130 = tpu.matmul %128, %129, %cst_55 {dimension_numbers = #tpu.dot_dimension_numbers<[1], [0], [0], [1], [0, 0, 1, 1], [], []>} : vector<8x64xbf16>, vector<64x32xbf16>, vector<8x32xf32> -> vector<8x32xf32>
    %c0_56 = arith.constant 0 : index
    %c0_57 = arith.constant 0 : index
    %131 = vector.load %arg14[%c0_56, %c0_57] : memref<1x32xf32, #tpu.memory_space<vmem>>, vector<1x32xf32>
    %132 = vector.broadcast %131 : vector<1x32xf32> to vector<8x32xf32>
    %133 = arith.addf %130, %132 : vector<8x32xf32>
    %134 = arith.addf %119, %133 : vector<8x32xf32>
    %cst_58 = arith.constant dense<0.000000e+00> : vector<8xf32>
    %135 = vector.multi_reduction <add>, %134, %cst_58 [1] : vector<8x32xf32> to vector<8xf32>
    %136 = vector.shape_cast %135 : vector<8xf32> to vector<8x1xf32>
    %cst_59 = arith.constant 3.200000e+01 : f32
    %137 = vector.broadcast %cst_59 : f32 to vector<8x1xf32>
    %138 = arith.divf %136, %137 : vector<8x1xf32>
    %139 = vector.broadcast %138 : vector<8x1xf32> to vector<8x32xf32>
    %140 = arith.subf %134, %139 : vector<8x32xf32>
    %141 = arith.mulf %140, %140 : vector<8x32xf32>
    %cst_60 = arith.constant dense<0.000000e+00> : vector<8xf32>
    %142 = vector.multi_reduction <add>, %141, %cst_60 [1] : vector<8x32xf32> to vector<8xf32>
    %143 = vector.shape_cast %142 : vector<8xf32> to vector<8x1xf32>
    %cst_61 = arith.constant 3.200000e+01 : f32
    %144 = vector.broadcast %cst_61 : f32 to vector<8x1xf32>
    %145 = arith.divf %143, %144 : vector<8x1xf32>
    %146 = vector.broadcast %138 : vector<8x1xf32> to vector<8x32xf32>
    %147 = arith.subf %134, %146 : vector<8x32xf32>
    %cst_62 = arith.constant 9.99999974E-6 : f32
    %148 = vector.broadcast %cst_62 : f32 to vector<8x1xf32>
    %149 = arith.addf %145, %148 : vector<8x1xf32>
    %150 = math.rsqrt %149 : vector<8x1xf32>
    %151 = vector.broadcast %150 : vector<8x1xf32> to vector<8x32xf32>
    %152 = arith.mulf %147, %151 : vector<8x32xf32>
    %c0_63 = arith.constant 0 : index
    %c0_64 = arith.constant 0 : index
    %153 = vector.load %arg17[%c0_63, %c0_64] : memref<1x32xf32, #tpu.memory_space<vmem>>, vector<1x32xf32>
    %154 = vector.broadcast %153 : vector<1x32xf32> to vector<8x32xf32>
    %155 = arith.mulf %152, %154 : vector<8x32xf32>
    %c0_65 = arith.constant 0 : index
    %c0_66 = arith.constant 0 : index
    %156 = vector.load %arg18[%c0_65, %c0_66] : memref<1x32xf32, #tpu.memory_space<vmem>>, vector<1x32xf32>
    %157 = vector.broadcast %156 : vector<1x32xf32> to vector<8x32xf32>
    %158 = arith.addf %155, %157 : vector<8x32xf32>
    %c0_67 = arith.constant 0 : index
    %c0_68 = arith.constant 0 : index
    %c0_69 = arith.constant 0 : index
    %159 = vector.load %arg19[%c0_67, %c0_68, %c0_69] : memref<1x8x32xf32, #tpu.memory_space<vmem>>, vector<1x8x32xf32>
    %160 = vector.shape_cast %159 : vector<1x8x32xf32> to vector<8x32xf32>
    %161 = vector.shape_cast %158 : vector<8x32xf32> to vector<1x8x32xf32>
    tpu.vector_store %arg19[%c0_67, %c0_68, %c0_69], %161 {strides = array<i32>} : memref<1x8x32xf32, #tpu.memory_space<vmem>>, vector<1x8x32xf32>,
    return
  }
  func.func @transform_0(%arg0: i32, %arg1: i32) -> (i32, i32, i32) {
    %c0_i32 = arith.constant 0 : i32
    %c0_i32_0 = arith.constant 0 : i32
    %c0_i32_1 = arith.constant 0 : i32
    return %arg0, %c0_i32, %c0_i32_0 : i32, i32, i32
  }
  func.func @transform_1(%arg0: i32, %arg1: i32) -> (i32, i32) {
    %c0_i32 = arith.constant 0 : i32
    %c0_i32_0 = arith.constant 0 : i32
    %c0_i32_1 = arith.constant 0 : i32
    return %c0_i32, %c0_i32_0 : i32, i32
  }
  func.func @transform_2(%arg0: i32, %arg1: i32) -> (i32, i32) {
    %c0_i32 = arith.constant 0 : i32
    %c0_i32_0 = arith.constant 0 : i32
    %c0_i32_1 = arith.constant 0 : i32
    return %c0_i32, %c0_i32_0 : i32, i32
  }
  func.func @transform_3(%arg0: i32, %arg1: i32) -> (i32, i32) {
    %c0_i32 = arith.constant 0 : i32
    %c0_i32_0 = arith.constant 0 : i32
    %c0_i32_1 = arith.constant 0 : i32
    return %c0_i32, %c0_i32_0 : i32, i32
  }
  func.func @transform_4(%arg0: i32, %arg1: i32) -> (i32, i32) {
    %c0_i32 = arith.constant 0 : i32
    %c0_i32_0 = arith.constant 0 : i32
    %c0_i32_1 = arith.constant 0 : i32
    return %c0_i32, %c0_i32_0 : i32, i32
  }
  func.func @transform_5(%arg0: i32, %arg1: i32) -> (i32, i32) {
    %c0_i32 = arith.constant 0 : i32
    %c0_i32_0 = arith.constant 0 : i32
    %c0_i32_1 = arith.constant 0 : i32
    return %c0_i32, %c0_i32_0 : i32, i32
  }
  func.func @transform_6(%arg0: i32, %arg1: i32) -> (i32, i32) {
    %c0_i32 = arith.constant 0 : i32
    %c0_i32_0 = arith.constant 0 : i32
    %c0_i32_1 = arith.constant 0 : i32
    return %c0_i32, %c0_i32_0 : i32, i32
  }
  func.func @transform_7(%arg0: i32, %arg1: i32) -> (i32, i32) {
    %c0_i32 = arith.constant 0 : i32
    %c0_i32_0 = arith.constant 0 : i32
    %c0_i32_1 = arith.constant 0 : i32
    return %c0_i32, %c0_i32_0 : i32, i32
  }
  func.func @transform_8(%arg0: i32, %arg1: i32) -> (i32, i32) {
    %c0_i32 = arith.constant 0 : i32
    %c0_i32_0 = arith.constant 0 : i32
    %c0_i32_1 = arith.constant 0 : i32
    return %c0_i32, %c0_i32_0 : i32, i32
  }
  func.func @transform_9(%arg0: i32, %arg1: i32) -> (i32, i32) {
    %c0_i32 = arith.constant 0 : i32
    %c0_i32_0 = arith.constant 0 : i32
    %c0_i32_1 = arith.constant 0 : i32
    return %c0_i32, %c0_i32_0 : i32, i32
  }
  func.func @transform_10(%arg0: i32, %arg1: i32) -> (i32, i32) {
    %c0_i32 = arith.constant 0 : i32
    %c0_i32_0 = arith.constant 0 : i32
    %c0_i32_1 = arith.constant 0 : i32
    return %c0_i32, %c0_i32_0 : i32, i32
  }
  func.func @transform_11(%arg0: i32, %arg1: i32) -> (i32, i32) {
    %c0_i32 = arith.constant 0 : i32
    %c0_i32_0 = arith.constant 0 : i32
    %c0_i32_1 = arith.constant 0 : i32
    return %c0_i32, %c0_i32_0 : i32, i32
  }
  func.func @transform_12(%arg0: i32, %arg1: i32) -> (i32, i32) {
    %c0_i32 = arith.constant 0 : i32
    %c0_i32_0 = arith.constant 0 : i32
    %c0_i32_1 = arith.constant 0 : i32
    return %c0_i32, %c0_i32_0 : i32, i32
  }
  func.func @transform_13(%arg0: i32, %arg1: i32) -> (i32, i32) {
    %c0_i32 = arith.constant 0 : i32
    %c0_i32_0 = arith.constant 0 : i32
    %c0_i32_1 = arith.constant 0 : i32
    return %c0_i32, %c0_i32_0 : i32, i32
  }
  func.func @transform_14(%arg0: i32, %arg1: i32) -> (i32, i32) {
    %c0_i32 = arith.constant 0 : i32
    %c0_i32_0 = arith.constant 0 : i32
    %c0_i32_1 = arith.constant 0 : i32
    return %c0_i32, %c0_i32_0 : i32, i32
  }
  func.func @transform_15(%arg0: i32, %arg1: i32) -> (i32, i32) {
    %c0_i32 = arith.constant 0 : i32
    %c0_i32_0 = arith.constant 0 : i32
    %c0_i32_1 = arith.constant 0 : i32
    return %c0_i32, %c0_i32_0 : i32, i32
  }
  func.func @transform_16(%arg0: i32, %arg1: i32) -> (i32, i32) {
    %c0_i32 = arith.constant 0 : i32
    %c0_i32_0 = arith.constant 0 : i32
    %c0_i32_1 = arith.constant 0 : i32
    return %c0_i32, %c0_i32_0 : i32, i32
  }
  func.func @transform_17(%arg0: i32, %arg1: i32) -> (i32, i32, i32) {
    %c0_i32 = arith.constant 0 : i32
    %c0_i32_0 = arith.constant 0 : i32
    return %arg0, %arg1, %c0_i32 : i32, i32, i32
  }
}

</mosaic_0001>

<llo_original>
// kernel: tpu_custom_call.1
$region0: #{tpu_custom_call.1}
  #allocation0 [shape = 'u32[]', space=smem, size = 0x4, offset = 0x4, fixed_abs, tag = 'smem constant byte address 0x4 - core index']
  #allocation1 [shape = 'u32[72,128]{1,0:T(1,128)}', space=vmem, size = 0x9000, scoped, tag = 'internal scratch']
  #allocation2 [shape = 'bf16[8,32]{1,0:T(8,128)(2,1)}', space=vmem, size = 0x800, scoped, tag = 'scratch operand']
  #allocation3 [shape = 'bf16[8,32]{1,0:T(8,128)(2,1)}', space=vmem, size = 0x800, scoped, tag = 'scratch operand']
  #allocation4 [shape = 'bf16[8,32]{1,0:T(8,128)(2,1)}', space=vmem, size = 0x800, scoped, tag = 'scratch operand']
  %s0 = inlined_call_operand.vmem [shape: f32[2,8,32], index: 0, kind: input, shape index: {}]
  %s1 = inlined_call_operand.vmem [shape: bf16[32,32], index: 1, kind: input, shape index: {}]
  %s2 = inlined_call_operand.vmem [shape: f32[1,32], index: 2, kind: input, shape index: {}]
  %s3 = inlined_call_operand.vmem [shape: bf16[32,32], index: 3, kind: input, shape index: {}]
  %s4 = inlined_call_operand.vmem [shape: f32[1,32], index: 4, kind: input, shape index: {}]
  %s5 = inlined_call_operand.hbm [shape: bf16[32,32], index: 5, kind: input, shape index: {}]
  %s6 = inlined_call_operand.vmem [shape: f32[1,32], index: 6, kind: input, shape index: {}]
  %s7 = inlined_call_operand.hbm [shape: bf16[32,32], index: 7, kind: input, shape index: {}]
  %s8 = inlined_call_operand.vmem [shape: f32[1,32], index: 8, kind: input, shape index: {}]
  %s9 = inlined_call_operand.hbm [shape: bf16[32,64], index: 9, kind: input, shape index: {}]
  %s10 = inlined_call_operand.vmem [shape: f32[1,64], index: 10, kind: input, shape index: {}]
  %s11 = inlined_call_operand.vmem [shape: bf16[64,32], index: 11, kind: input, shape index: {}]
  %s12 = inlined_call_operand.vmem [shape: f32[1,32], index: 12, kind: input, shape index: {}]
  %s13 = inlined_call_operand.vmem [shape: f32[1,32], index: 13, kind: input, shape index: {}]
  %s14 = inlined_call_operand.vmem [shape: f32[1,32], index: 14, kind: input, shape index: {}]
  %s15 = inlined_call_operand.vmem [shape: f32[1,32], index: 15, kind: input, shape index: {}]
  %s16 = inlined_call_operand.vmem [shape: f32[1,32], index: 16, kind: input, shape index: {}]
  %s17 = inlined_call_operand.hbm [shape: f32[2,8,32], index: 17, kind: output, shape index: {}]
  %s18 = sld [smem:[#allocation0]]
  $region117: #{tpu_custom_call.1} parent=0
    _
  %s20 = ssub.s32 1, %s18
  %s21 = scalar_select 0, %s20, %s18
  $region1: #{tpu_custom_call.1} parent=0
    #allocation5 [shape = 'u8[8192]{0}', space=vmem, size = 0x2000, scoped, tag = 'input window, operand 5, single buffered']
    #allocation6 [shape = 's32[2]{0}', space=sflag, size = 0x8, scoped, tag = 'scoped memory for tpu_custom_call.1']
    #allocation7 [shape = 's32[2]{0}', space=sflag, size = 0x8, scoped, tag = 'scoped memory for tpu_custom_call.1']
    #allocation8 [shape = 'u8[8192]{0}', space=vmem, size = 0x2000, scoped, tag = 'input window, operand 7, single buffered']
    #allocation9 [shape = 's32[1]{0}', space=sflag, size = 0x4, scoped, tag = 'scoped memory for tpu_custom_call.1']
    #allocation10 [shape = 'u8[8192]{0}', space=vmem, size = 0x2000, scoped, tag = 'input window, operand 9, single buffered']
    #allocation11 [shape = 'u8[8192]{0}', space=vmem, size = 0x2000, scoped, tag = 'output window, operand 0']
    %22 = vsyncpa [#allocation6], 0
    %23 = vsyncpa [#allocation9], 0
    %24 = vsyncpa [#allocation7], 0
    %s25 = scalar_lea.sflag [#allocation7], 1
    %26 = vsyncpa %s25, 0
    loop: start=0, step=1, limit=4
    $region2: #{tpu_custom_call.1} parent=1 // loop_pre_header
      _
    $region3: #{tpu_custom_call.1} parent=1 // loop_header
      %s28 = sphi 0, %s32
      %p29 = scmp.ge.s32.totalorder %s28, 4
      %s35 = sphi 0, %s47
      %s36 = sphi 0, %s43
      %s37 = sphi 0, %s35
      %s38 = sphi 0, %s36
      %s39 = sphi 0, %s37
      %s40 = sphi 0, %s38
      %s50 = sphi 0, %s52
      %s53 = sphi 0, %s50
      %s54 = sphi 0, %s53
      %s70 = sphi 0, %s54
      %s74 = sphi 0, %s74
      %s76 = sphi 0, %s74
      %s77 = sphi 0, %s76
      %s91 = sphi 0, %s77
      %s95 = sphi 0, %s95
      %s97 = sphi 0, %s95
      %s98 = sphi 0, %s97
      %s112 = sphi 0, %s98
      %s116 = sphi 0, %s116
      %s118 = sphi 0, %s116
      %s119 = sphi 0, %s118
      %s133 = sphi 0, %s119
      %s137 = sphi 0, %s137
      %s139 = sphi 0, %s137
      %s140 = sphi 0, %s139
      %s154 = sphi 0, %s140
      %s158 = sphi 0, %s158
      %s160 = sphi 0, %s158
      %s161 = sphi 0, %s160
      %s175 = sphi 0, %s161
      %s179 = sphi 0, %s179
      %s181 = sphi 0, %s179
      %s182 = sphi 0, %s181
      %s196 = sphi 0, %s182
      %s200 = sphi 0, %s200
      %s202 = sphi 0, %s200
      %s203 = sphi 0, %s202
      %s217 = sphi 0, %s203
      %s221 = sphi 0, %s221
      %s223 = sphi 0, %s221
      %s224 = sphi 0, %s223
      %s238 = sphi 0, %s224
      %s242 = sphi 0, %s242
      %s244 = sphi 0, %s242
      %s245 = sphi 0, %s244
      %s259 = sphi 0, %s245
      %s263 = sphi 0, %s263
      %s265 = sphi 0, %s263
      %s266 = sphi 0, %s265
      %s280 = sphi 0, %s266
      %s284 = sphi 0, %s284
      %s286 = sphi 0, %s284
      %s287 = sphi 0, %s286
      %s301 = sphi 0, %s287
      %s305 = sphi 0, %s305
      %s307 = sphi 0, %s305
      %s308 = sphi 0, %s307
      %s322 = sphi 0, %s308
      %s326 = sphi 0, %s326
      %s328 = sphi 0, %s326
      %s329 = sphi 0, %s328
      %s343 = sphi 0, %s329
      %s347 = sphi 0, %s347
      %s349 = sphi 0, %s347
      %s350 = sphi 0, %s349
      %s364 = sphi 0, %s350
      %s368 = sphi 0, %s368
      %s370 = sphi 0, %s368
      %s371 = sphi 0, %s370
      %s385 = sphi 0, %s371
      %s389 = sphi 0, %s389
      %s391 = sphi 0, %s389
      %s392 = sphi 0, %s391
      %s406 = sphi 0, %s392
      %s414 = sphi 0, %s416
      %s417 = sphi 0, %s414
      %s418 = sphi 0, %s417
      %s434 = sphi 0, %s418
    $region4: #{tpu_custom_call.1} parent=1 // loop_header_branch
      %31 = sbr.rel (%p29) target = $region8
    $region5: #{tpu_custom_call.1} parent=1 // loop_body
      %s33 = ssub.s32 %s28, 1
      %s34 = ssub.s32 %s28, 2
      %s41 = sadd.s32 1, %s36
      %p42 = scmp.ge.s32.totalorder %s41, 1
      %s43 = scalar_select %p42, 0, %s41
      %s44 = sadd.s32 1, %s35
      %s45 = scalar_select %p42, %s44, %s35
      %p46 = scmp.ge.s32.totalorder %s45, 2
      %s47 = scalar_select %p46, 0, %s45
      %s48 = ssub.s32 %s35, %s47
      %p49 = scmp.eq.s32.totalorder %s48, 0
      %s51 = sadd.s32 %s50, 1
      %s52 = scalar_select %p49, %s50, %s51
      %p55 = pneg %p49
      %p56 = scmp.eq.s32.totalorder %s28, 1
      %p57 = por %p55, %p56
      %p58 = scmp.ne.s32.totalorder %s50, %s53
      %p59 = scmp.eq.s32.totalorder %s28, 0
      %p60 = por %p58, %p59
      %p61 = scmp.ne.s32.totalorder %s50, %s53
      %p62 = scmp.eq.s32.totalorder %s33, 1
      %p63 = por %p61, %p62
      %p64 = scmp.ne.s32.totalorder %s53, %s54
      %p65 = scmp.eq.s32.totalorder %s33, 0
      %p66 = por %p64, %p65
      %p67 = scmp.ne.s32.totalorder %s53, %s54
      %p68 = scmp.eq.s32.totalorder %s34, 1
      %p69 = por %p67, %p68
      %p71 = scmp.ne.s32.totalorder %s54, %s70
      %p72 = scmp.eq.s32.totalorder %s34, 0
      %p73 = por %p71, %p72
      %s75 = sadd.s32 %s74, 1
      %p78 = scmp.eq.s32.totalorder %s28, 1
      %p79 = scmp.ne.s32.totalorder %s74, %s76
      %p80 = scmp.eq.s32.totalorder %s28, 0
      %p81 = por %p79, %p80
      %p82 = scmp.ne.s32.totalorder %s74, %s76
      %p83 = scmp.eq.s32.totalorder %s33, 1
      %p84 = por %p82, %p83
      %p85 = scmp.ne.s32.totalorder %s76, %s77
      %p86 = scmp.eq.s32.totalorder %s33, 0
      %p87 = por %p85, %p86
      %p88 = scmp.ne.s32.totalorder %s76, %s77
      %p89 = scmp.eq.s32.totalorder %s34, 1
      %p90 = por %p88, %p89
      %p92 = scmp.ne.s32.totalorder %s77, %s91
      %p93 = scmp.eq.s32.totalorder %s34, 0
      %p94 = por %p92, %p93
      %s96 = sadd.s32 %s95, 1
      %p99 = scmp.eq.s32.totalorder %s28, 1
      %p100 = scmp.ne.s32.totalorder %s95, %s97
      %p101 = scmp.eq.s32.totalorder %s28, 0
      %p102 = por %p100, %p101
      %p103 = scmp.ne.s32.totalorder %s95, %s97
      %p104 = scmp.eq.s32.totalorder %s33, 1
      %p105 = por %p103, %p104
      %p106 = scmp.ne.s32.totalorder %s97, %s98
      %p107 = scmp.eq.s32.totalorder %s33, 0
      %p108 = por %p106, %p107
      %p109 = scmp.ne.s32.totalorder %s97, %s98
      %p110 = scmp.eq.s32.totalorder %s34, 1
      %p111 = por %p109, %p110
      %p113 = scmp.ne.s32.totalorder %s98, %s112
      %p114 = scmp.eq.s32.totalorder %s34, 0
      %p115 = por %p113, %p114
      %s117 = sadd.s32 %s116, 1
      %p120 = scmp.eq.s32.totalorder %s28, 1
      %p121 = scmp.ne.s32.totalorder %s116, %s118
      %p122 = scmp.eq.s32.totalorder %s28, 0
      %p123 = por %p121, %p122
      %p124 = scmp.ne.s32.totalorder %s116, %s118
      %p125 = scmp.eq.s32.totalorder %s33, 1
      %p126 = por %p124, %p125
      %p127 = scmp.ne.s32.totalorder %s118, %s119
      %p128 = scmp.eq.s32.totalorder %s33, 0
      %p129 = por %p127, %p128
      %p130 = scmp.ne.s32.totalorder %s118, %s119
      %p131 = scmp.eq.s32.totalorder %s34, 1
      %p132 = por %p130, %p131
      %p134 = scmp.ne.s32.totalorder %s119, %s133
      %p135 = scmp.eq.s32.totalorder %s34, 0
      %p136 = por %p134, %p135
      %s138 = sadd.s32 %s137, 1
      %p141 = scmp.eq.s32.totalorder %s28, 1
      %p142 = scmp.ne.s32.totalorder %s137, %s139
      %p143 = scmp.eq.s32.totalorder %s28, 0
      %p144 = por %p142, %p143
      %p145 = scmp.ne.s32.totalorder %s137, %s139
      %p146 = scmp.eq.s32.totalorder %s33, 1
      %p147 = por %p145, %p146
      %p148 = scmp.ne.s32.totalorder %s139, %s140
      %p149 = scmp.eq.s32.totalorder %s33, 0
      %p150 = por %p148, %p149
      %p151 = scmp.ne.s32.totalorder %s139, %s140
      %p152 = scmp.eq.s32.totalorder %s34, 1
      %p153 = por %p151, %p152
      %p155 = scmp.ne.s32.totalorder %s140, %s154
      %p156 = scmp.eq.s32.totalorder %s34, 0
      %p157 = por %p155, %p156
      %s159 = sadd.s32 %s158, 1
      %p162 = scmp.eq.s32.totalorder %s28, 1
      %p163 = scmp.ne.s32.totalorder %s158, %s160
      %p164 = scmp.eq.s32.totalorder %s28, 0
      %p165 = por %p163, %p164
      %p166 = scmp.ne.s32.totalorder %s158, %s160
      %p167 = scmp.eq.s32.totalorder %s33, 1
      %p168 = por %p166, %p167
      %p169 = scmp.ne.s32.totalorder %s160, %s161
      %p170 = scmp.eq.s32.totalorder %s33, 0
      %p171 = por %p169, %p170
      %p172 = scmp.ne.s32.totalorder %s160, %s161
      %p173 = scmp.eq.s32.totalorder %s34, 1
      %p174 = por %p172, %p173
      %p176 = scmp.ne.s32.totalorder %s161, %s175
      %p177 = scmp.eq.s32.totalorder %s34, 0
      %p178 = por %p176, %p177
      %s180 = sadd.s32 %s179, 1
      %p183 = scmp.eq.s32.totalorder %s28, 1
      %p184 = scmp.ne.s32.totalorder %s179, %s181
      %p185 = scmp.eq.s32.totalorder %s28, 0
      %p186 = por %p184, %p185
      %p187 = scmp.ne.s32.totalorder %s179, %s181
      %p188 = scmp.eq.s32.totalorder %s33, 1
      %p189 = por %p187, %p188
      %p190 = scmp.ne.s32.totalorder %s181, %s182
      %p191 = scmp.eq.s32.totalorder %s33, 0
      %p192 = por %p190, %p191
      %p193 = scmp.ne.s32.totalorder %s181, %s182
      %p194 = scmp.eq.s32.totalorder %s34, 1
      %p195 = por %p193, %p194
      %p197 = scmp.ne.s32.totalorder %s182, %s196
      %p198 = scmp.eq.s32.totalorder %s34, 0
      %p199 = por %p197, %p198
      %s201 = sadd.s32 %s200, 1
      %p204 = scmp.eq.s32.totalorder %s28, 1
      %p205 = scmp.ne.s32.totalorder %s200, %s202
      %p206 = scmp.eq.s32.totalorder %s28, 0
      %p207 = por %p205, %p206
      %p208 = scmp.ne.s32.totalorder %s200, %s202
      %p209 = scmp.eq.s32.totalorder %s33, 1
      %p210 = por %p208, %p209
      %p211 = scmp.ne.s32.totalorder %s202, %s203
      %p212 = scmp.eq.s32.totalorder %s33, 0
      %p213 = por %p211, %p212
      %p214 = scmp.ne.s32.totalorder %s202, %s203
      %p215 = scmp.eq.s32.totalorder %s34, 1
      %p216 = por %p214, %p215
      %p218 = scmp.ne.s32.totalorder %s203, %s217
      %p219 = scmp.eq.s32.totalorder %s34, 0
      %p220 = por %p218, %p219
      %s222 = sadd.s32 %s221, 1
      %p225 = scmp.eq.s32.totalorder %s28, 1
      %p226 = scmp.ne.s32.totalorder %s221, %s223
      %p227 = scmp.eq.s32.totalorder %s28, 0
      %p228 = por %p226, %p227
      %p229 = scmp.ne.s32.totalorder %s221, %s223
      %p230 = scmp.eq.s32.totalorder %s33, 1
      %p231 = por %p229, %p230
      %p232 = scmp.ne.s32.totalorder %s223, %s224
      %p233 = scmp.eq.s32.totalorder %s33, 0
      %p234 = por %p232, %p233
      %p235 = scmp.ne.s32.totalorder %s223, %s224
      %p236 = scmp.eq.s32.totalorder %s34, 1
      %p237 = por %p235, %p236
      %p239 = scmp.ne.s32.totalorder %s224, %s238
      %p240 = scmp.eq.s32.totalorder %s34, 0
      %p241 = por %p239, %p240
      %s243 = sadd.s32 %s242, 1
      %p246 = scmp.eq.s32.totalorder %s28, 1
      %p247 = scmp.ne.s32.totalorder %s242, %s244
      %p248 = scmp.eq.s32.totalorder %s28, 0
      %p249 = por %p247, %p248
      %p250 = scmp.ne.s32.totalorder %s242, %s244
      %p251 = scmp.eq.s32.totalorder %s33, 1
      %p252 = por %p250, %p251
      %p253 = scmp.ne.s32.totalorder %s244, %s245
      %p254 = scmp.eq.s32.totalorder %s33, 0
      %p255 = por %p253, %p254
      %p256 = scmp.ne.s32.totalorder %s244, %s245
      %p257 = scmp.eq.s32.totalorder %s34, 1
      %p258 = por %p256, %p257
      %p260 = scmp.ne.s32.totalorder %s245, %s259
      %p261 = scmp.eq.s32.totalorder %s34, 0
      %p262 = por %p260, %p261
      %s264 = sadd.s32 %s263, 1
      %p267 = scmp.eq.s32.totalorder %s28, 1
      %p268 = scmp.ne.s32.totalorder %s263, %s265
      %p269 = scmp.eq.s32.totalorder %s28, 0
      %p270 = por %p268, %p269
      %p271 = scmp.ne.s32.totalorder %s263, %s265
      %p272 = scmp.eq.s32.totalorder %s33, 1
      %p273 = por %p271, %p272
      %p274 = scmp.ne.s32.totalorder %s265, %s266
      %p275 = scmp.eq.s32.totalorder %s33, 0
      %p276 = por %p274, %p275
      %p277 = scmp.ne.s32.totalorder %s265, %s266
      %p278 = scmp.eq.s32.totalorder %s34, 1
      %p279 = por %p277, %p278
      %p281 = scmp.ne.s32.totalorder %s266, %s280
      %p282 = scmp.eq.s32.totalorder %s34, 0
      %p283 = por %p281, %p282
      %s285 = sadd.s32 %s284, 1
      %p288 = scmp.eq.s32.totalorder %s28, 1
      %p289 = scmp.ne.s32.totalorder %s284, %s286
      %p290 = scmp.eq.s32.totalorder %s28, 0
      %p291 = por %p289, %p290
      %p292 = scmp.ne.s32.totalorder %s284, %s286
      %p293 = scmp.eq.s32.totalorder %s33, 1
      %p294 = por %p292, %p293
      %p295 = scmp.ne.s32.totalorder %s286, %s287
      %p296 = scmp.eq.s32.totalorder %s33, 0
      %p297 = por %p295, %p296
      %p298 = scmp.ne.s32.totalorder %s286, %s287
      %p299 = scmp.eq.s32.totalorder %s34, 1
      %p300 = por %p298, %p299
      %p302 = scmp.ne.s32.totalorder %s287, %s301
      %p303 = scmp.eq.s32.totalorder %s34, 0
      %p304 = por %p302, %p303
      %s306 = sadd.s32 %s305, 1
      %p309 = scmp.eq.s32.totalorder %s28, 1
      %p310 = scmp.ne.s32.totalorder %s305, %s307
      %p311 = scmp.eq.s32.totalorder %s28, 0
      %p312 = por %p310, %p311
      %p313 = scmp.ne.s32.totalorder %s305, %s307
      %p314 = scmp.eq.s32.totalorder %s33, 1
      %p315 = por %p313, %p314
      %p316 = scmp.ne.s32.totalorder %s307, %s308
      %p317 = scmp.eq.s32.totalorder %s33, 0
      %p318 = por %p316, %p317
      %p319 = scmp.ne.s32.totalorder %s307, %s308
      %p320 = scmp.eq.s32.totalorder %s34, 1
      %p321 = por %p319, %p320
      %p323 = scmp.ne.s32.totalorder %s308, %s322
      %p324 = scmp.eq.s32.totalorder %s34, 0
      %p325 = por %p323, %p324
      %s327 = sadd.s32 %s326, 1
      %p330 = scmp.eq.s32.totalorder %s28, 1
      %p331 = scmp.ne.s32.totalorder %s326, %s328
      %p332 = scmp.eq.s32.totalorder %s28, 0
      %p333 = por %p331, %p332
      %p334 = scmp.ne.s32.totalorder %s326, %s328
      %p335 = scmp.eq.s32.totalorder %s33, 1
      %p336 = por %p334, %p335
      %p337 = scmp.ne.s32.totalorder %s328, %s329
      %p338 = scmp.eq.s32.totalorder %s33, 0
      %p339 = por %p337, %p338
      %p340 = scmp.ne.s32.totalorder %s328, %s329
      %p341 = scmp.eq.s32.totalorder %s34, 1
      %p342 = por %p340, %p341
      %p344 = scmp.ne.s32.totalorder %s329, %s343
      %p345 = scmp.eq.s32.totalorder %s34, 0
      %p346 = por %p344, %p345
      %s348 = sadd.s32 %s347, 1
      %p351 = scmp.eq.s32.totalorder %s28, 1
      %p352 = scmp.ne.s32.totalorder %s347, %s349
      %p353 = scmp.eq.s32.totalorder %s28, 0
      %p354 = por %p352, %p353
      %p355 = scmp.ne.s32.totalorder %s347, %s349
      %p356 = scmp.eq.s32.totalorder %s33, 1
      %p357 = por %p355, %p356
      %p358 = scmp.ne.s32.totalorder %s349, %s350
      %p359 = scmp.eq.s32.totalorder %s33, 0
      %p360 = por %p358, %p359
      %p361 = scmp.ne.s32.totalorder %s349, %s350
      %p362 = scmp.eq.s32.totalorder %s34, 1
      %p363 = por %p361, %p362
      %p365 = scmp.ne.s32.totalorder %s350, %s364
      %p366 = scmp.eq.s32.totalorder %s34, 0
      %p367 = por %p365, %p366
      %s369 = sadd.s32 %s368, 1
      %p372 = scmp.eq.s32.totalorder %s28, 1
      %p373 = scmp.ne.s32.totalorder %s368, %s370
      %p374 = scmp.eq.s32.totalorder %s28, 0
      %p375 = por %p373, %p374
      %p376 = scmp.ne.s32.totalorder %s368, %s370
      %p377 = scmp.eq.s32.totalorder %s33, 1
      %p378 = por %p376, %p377
      %p379 = scmp.ne.s32.totalorder %s370, %s371
      %p380 = scmp.eq.s32.totalorder %s33, 0
      %p381 = por %p379, %p380
      %p382 = scmp.ne.s32.totalorder %s370, %s371
      %p383 = scmp.eq.s32.totalorder %s34, 1
      %p384 = por %p382, %p383
      %p386 = scmp.ne.s32.totalorder %s371, %s385
      %p387 = scmp.eq.s32.totalorder %s34, 0
      %p388 = por %p386, %p387
      %s390 = sadd.s32 %s389, 1
      %p393 = scmp.eq.s32.totalorder %s28, 1
      %p394 = scmp.ne.s32.totalorder %s389, %s391
      %p395 = scmp.eq.s32.totalorder %s28, 0
      %p396 = por %p394, %p395
      %p397 = scmp.ne.s32.totalorder %s389, %s391
      %p398 = scmp.eq.s32.totalorder %s33, 1
      %p399 = por %p397, %p398
      %p400 = scmp.ne.s32.totalorder %s391, %s392
      %p401 = scmp.eq.s32.totalorder %s33, 0
      %p402 = por %p400, %p401
      %p403 = scmp.ne.s32.totalorder %s391, %s392
      %p404 = scmp.eq.s32.totalorder %s34, 1
      %p405 = por %p403, %p404
      %p407 = scmp.ne.s32.totalorder %s392, %s406
      %p408 = scmp.eq.s32.totalorder %s34, 0
      %p409 = por %p407, %p408
      %s410 = ssub.s32 %s35, %s47
      %s411 = ssub.s32 %s36, %s43
      %s412 = sor.u32 %s410, %s411
      %p413 = scmp.eq.s32.totalorder %s412, 0
      %s415 = sadd.s32 %s414, 1
      %s416 = scalar_select %p413, %s414, %s415
      %p419 = pneg %p413
      %p420 = scmp.eq.s32.totalorder %s28, 1
      %p421 = por %p419, %p420
      %p422 = scmp.ne.s32.totalorder %s414, %s417
      %p423 = scmp.eq.s32.totalorder %s28, 0
      %p424 = por %p422, %p423
      %p425 = scmp.ne.s32.totalorder %s414, %s417
      %p426 = scmp.eq.s32.totalorder %s33, 1
      %p427 = por %p425, %p426
      %p428 = scmp.ne.s32.totalorder %s417, %s418
      %p429 = scmp.eq.s32.totalorder %s33, 0
      %p430 = por %p428, %p429
      %p431 = scmp.ne.s32.totalorder %s417, %s418
      %p432 = scmp.eq.s32.totalorder %s34, 1
      %p433 = por %p431, %p432
      %p435 = scmp.ne.s32.totalorder %s418, %s434
      %p436 = scmp.eq.s32.totalorder %s34, 0
      %p437 = por %p435, %p436
      %p438 = scmp.le.s32.totalorder 1, %s28
      %p439 = scmp.lt.s32.totalorder %s28, 3
      %p440 = pnand %p438, %p439
      %p441 = pneg %p440
      // Predicated region
      $region9: #{tpu_custom_call.1} parent=5 // pred_check
        _
      $region10: #{tpu_custom_call.1} parent=5 // pred_check_branch
        %443 = sbr.rel (%p440) target = $region12
      $region11: #{tpu_custom_call.1} parent=5 // pred_region
        %s444 = ssub.s32 %s28, 1
        // Predicated region
        $region13: #{tpu_custom_call.1} parent=11 // pred_check
          %p445 = pneg %p87
        $region14: #{tpu_custom_call.1} parent=11 // pred_check_branch
          %447 = sbr.rel (%p445) target = $region16
        $region15: #{tpu_custom_call.1} parent=11 // pred_region
          _
        $region16: #{tpu_custom_call.1} parent=11 // pred_fallthru
          _
        // Predicated region
        $region17: #{tpu_custom_call.1} parent=11 // pred_check
          %p448 = pneg %p108
        $region18: #{tpu_custom_call.1} parent=11 // pred_check_branch
          %450 = sbr.rel (%p448) target = $region20
        $region19: #{tpu_custom_call.1} parent=11 // pred_region
          _
        $region20: #{tpu_custom_call.1} parent=11 // pred_fallthru
          _
        // Predicated region
        $region21: #{tpu_custom_call.1} parent=11 // pred_check
          %p451 = pneg %p129
        $region22: #{tpu_custom_call.1} parent=11 // pred_check_branch
          %453 = sbr.rel (%p451) target = $region24
        $region23: #{tpu_custom_call.1} parent=11 // pred_region
          _
        $region24: #{tpu_custom_call.1} parent=11 // pred_fallthru
          _
        // Predicated region
        $region25: #{tpu_custom_call.1} parent=11 // pred_check
          %p454 = pneg %p150
        $region26: #{tpu_custom_call.1} parent=11 // pred_check_branch
          %456 = sbr.rel (%p454) target = $region28
        $region27: #{tpu_custom_call.1} parent=11 // pred_region
          _
        $region28: #{tpu_custom_call.1} parent=11 // pred_fallthru
          _
        // Predicated region
        $region29: #{tpu_custom_call.1} parent=11 // pred_check
          %p457 = pneg %p171
        $region30: #{tpu_custom_call.1} parent=11 // pred_check_branch
          %459 = sbr.rel (%p457) target = $region32
        $region31: #{tpu_custom_call.1} parent=11 // pred_region
          %461 = vsyncadd [#allocation6], 0
          %s462 = sshll.u32 %s5, 4
          %s463 = int_to_ptr.hbm [resolvable:$true] %s462
          %s464 = sshll.u32 [#allocation5], 4
          %s465 = int_to_ptr.vmem [resolvable:$true] %s464
          %470 = dma.hbm_to_vmem [thread:$0]  %s463, 256, %s465, [#allocation6], 64, 64, 4
        $region32: #{tpu_custom_call.1} parent=11 // pred_fallthru
          _
        // Predicated region
        $region33: #{tpu_custom_call.1} parent=11 // pred_check
          %p471 = pneg %p192
        $region34: #{tpu_custom_call.1} parent=11 // pred_check_branch
          %473 = sbr.rel (%p471) target = $region36
        $region35: #{tpu_custom_call.1} parent=11 // pred_region
          _
        $region36: #{tpu_custom_call.1} parent=11 // pred_fallthru
          _
        // Predicated region
        $region37: #{tpu_custom_call.1} parent=11 // pred_check
          %p474 = pneg %p213
        $region38: #{tpu_custom_call.1} parent=11 // pred_check_branch
          %476 = sbr.rel (%p474) target = $region40
        $region39: #{tpu_custom_call.1} parent=11 // pred_region
          %478 = vsyncadd [#allocation9], 0
          %s479 = sshll.u32 %s7, 4
          %s480 = int_to_ptr.hbm [resolvable:$true] %s479
          %s481 = sshll.u32 [#allocation8], 4
          %s482 = int_to_ptr.vmem [resolvable:$true] %s481
          %487 = dma.hbm_to_vmem [thread:$0]  %s480, 256, %s482, [#allocation9], 64, 64, 4
        $region40: #{tpu_custom_call.1} parent=11 // pred_fallthru
          _
        // Predicated region
        $region41: #{tpu_custom_call.1} parent=11 // pred_check
          %p488 = pneg %p234
        $region42: #{tpu_custom_call.1} parent=11 // pred_check_branch
          %490 = sbr.rel (%p488) target = $region44
        $region43: #{tpu_custom_call.1} parent=11 // pred_region
          _
        $region44: #{tpu_custom_call.1} parent=11 // pred_fallthru
          _
        // Predicated region
        $region45: #{tpu_custom_call.1} parent=11 // pred_check
          %p491 = pneg %p255
        $region46: #{tpu_custom_call.1} parent=11 // pred_check_branch
          %493 = sbr.rel (%p491) target = $region48
        $region47: #{tpu_custom_call.1} parent=11 // pred_region
          %495 = vsyncadd [#allocation9], 0
          %s496 = sshll.u32 %s9, 4
          %s497 = int_to_ptr.hbm [resolvable:$true] %s496
          %s498 = sshll.u32 [#allocation10], 4
          %s499 = int_to_ptr.vmem [resolvable:$true] %s498
          %504 = dma.hbm_to_vmem [thread:$0]  %s497, 256, %s499, [#allocation9], 64, 64, 4
        $region48: #{tpu_custom_call.1} parent=11 // pred_fallthru
          _
        // Predicated region
        $region49: #{tpu_custom_call.1} parent=11 // pred_check
          %p505 = pneg %p276
        $region50: #{tpu_custom_call.1} parent=11 // pred_check_branch
          %507 = sbr.rel (%p505) target = $region52
        $region51: #{tpu_custom_call.1} parent=11 // pred_region
          _
        $region52: #{tpu_custom_call.1} parent=11 // pred_fallthru
          _
        // Predicated region
        $region53: #{tpu_custom_call.1} parent=11 // pred_check
          %p508 = pneg %p297
        $region54: #{tpu_custom_call.1} parent=11 // pred_check_branch
          %510 = sbr.rel (%p508) target = $region56
        $region55: #{tpu_custom_call.1} parent=11 // pred_region
          _
        $region56: #{tpu_custom_call.1} parent=11 // pred_fallthru
          _
        // Predicated region
        $region57: #{tpu_custom_call.1} parent=11 // pred_check
          %p511 = pneg %p318
        $region58: #{tpu_custom_call.1} parent=11 // pred_check_branch
          %513 = sbr.rel (%p511) target = $region60
        $region59: #{tpu_custom_call.1} parent=11 // pred_region
          _
        $region60: #{tpu_custom_call.1} parent=11 // pred_fallthru
          _
        // Predicated region
        $region61: #{tpu_custom_call.1} parent=11 // pred_check
          %p514 = pneg %p339
        $region62: #{tpu_custom_call.1} parent=11 // pred_check_branch
          %516 = sbr.rel (%p514) target = $region64
        $region63: #{tpu_custom_call.1} parent=11 // pred_region
          _
        $region64: #{tpu_custom_call.1} parent=11 // pred_fallthru
          _
        // Predicated region
        $region65: #{tpu_custom_call.1} parent=11 // pred_check
          %p517 = pneg %p360
        $region66: #{tpu_custom_call.1} parent=11 // pred_check_branch
          %519 = sbr.rel (%p517) target = $region68
        $region67: #{tpu_custom_call.1} parent=11 // pred_region
          _
        $region68: #{tpu_custom_call.1} parent=11 // pred_fallthru
          _
        // Predicated region
        $region69: #{tpu_custom_call.1} parent=11 // pred_check
          %p520 = pneg %p381
        $region70: #{tpu_custom_call.1} parent=11 // pred_check_branch
          %522 = sbr.rel (%p520) target = $region72
        $region71: #{tpu_custom_call.1} parent=11 // pred_region
          _
        $region72: #{tpu_custom_call.1} parent=11 // pred_fallthru
          _
        // Predicated region
        $region73: #{tpu_custom_call.1} parent=11 // pred_check
          %p523 = pneg %p402
        $region74: #{tpu_custom_call.1} parent=11 // pred_check_branch
          %525 = sbr.rel (%p523) target = $region76
        $region75: #{tpu_custom_call.1} parent=11 // pred_region
          _
        $region76: #{tpu_custom_call.1} parent=11 // pred_fallthru
          _
      $region12: #{tpu_custom_call.1} parent=5 // pred_fallthru
        _
      %p526 = scmp.lt.s32.totalorder %s28, 2
      // Predicated region
      $region77: #{tpu_custom_call.1} parent=5 // pred_check
        %p527 = pneg %p526
      $region78: #{tpu_custom_call.1} parent=5 // pred_check_branch
        %529 = sbr.rel (%p527) target = $region80
      $region79: #{tpu_custom_call.1} parent=5 // pred_region
        // Predicated region
        $region81: #{tpu_custom_call.1} parent=79 // pred_check
          %p530 = pneg %p60
        $region82: #{tpu_custom_call.1} parent=79 // pred_check_branch
          %532 = sbr.rel (%p530) target = $region84
        $region83: #{tpu_custom_call.1} parent=79 // pred_region
          %p533 = scmp.lt.s32.totalorder %s35, 1
          %s534 = scalar_select %p533, %s35, 1
          %s535 = smul.addr %s534, 8
          %s536 = scalar_lea.vmem %s0, %s535
        $region84: #{tpu_custom_call.1} parent=79 // pred_fallthru
          _
      $region80: #{tpu_custom_call.1} parent=5 // pred_fallthru
        _
      %p537 = scmp.le.s32.totalorder 1, %s28
      %p538 = scmp.lt.s32.totalorder %s28, 3
      %p539 = pnand %p537, %p538
      %p540 = pneg %p539
      // Predicated region
      $region85: #{tpu_custom_call.1} parent=5 // pred_check
        _
      $region86: #{tpu_custom_call.1} parent=5 // pred_check_branch
        %542 = sbr.rel (%p539) target = $region88
      $region87: #{tpu_custom_call.1} parent=5 // pred_region
        %s543 = ssub.s32 %s28, 1
        // Predicated region
        $region89: #{tpu_custom_call.1} parent=87 // pred_check
          %p544 = pneg %p171
        $region90: #{tpu_custom_call.1} parent=87 // pred_check_branch
          %546 = sbr.rel (%p544) target = $region92
        $region91: #{tpu_custom_call.1} parent=87 // pred_region
          %548 = dma.done [#allocation6], 256
        $region92: #{tpu_custom_call.1} parent=87 // pred_fallthru
          _
        // Predicated region
        $region93: #{tpu_custom_call.1} parent=87 // pred_check
          %p549 = pneg %p213
        $region94: #{tpu_custom_call.1} parent=87 // pred_check_branch
          %551 = sbr.rel (%p549) target = $region96
        $region95: #{tpu_custom_call.1} parent=87 // pred_region
          %553 = dma.done [#allocation9], 256
        $region96: #{tpu_custom_call.1} parent=87 // pred_fallthru
          _
        // Predicated region
        $region97: #{tpu_custom_call.1} parent=87 // pred_check
          %p554 = pneg %p255
        $region98: #{tpu_custom_call.1} parent=87 // pred_check_branch
          %556 = sbr.rel (%p554) target = $region100
        $region99: #{tpu_custom_call.1} parent=87 // pred_region
          %558 = dma.done [#allocation9], 256
        $region100: #{tpu_custom_call.1} parent=87 // pred_fallthru
          _
        %p559 = scmp.lt.s32.totalorder %s37, 1
        %s560 = scalar_select %p559, %s37, 1
        %s561 = smul.addr %s560, 8
        %s562 = scalar_lea.vmem %s0, %s561
        %p563 = pneg %p66
        %p564 = pneg %p63
        %p565 = pneg %p87
        %p566 = pneg %p84
        %p567 = pneg %p108
        %p568 = pneg %p105
        %p569 = pneg %p129
        %p570 = pneg %p126
        %p571 = pneg %p150
        %p572 = pneg %p147
        %p573 = pneg %p171
        %p574 = pneg %p168
        %p575 = pneg %p192
        %p576 = pneg %p189
        %p577 = pneg %p213
        %p578 = pneg %p210
        %p579 = pneg %p234
        %p580 = pneg %p231
        %p581 = pneg %p255
        %p582 = pneg %p252
        %p583 = pneg %p276
        %p584 = pneg %p273
        %p585 = pneg %p297
        %p586 = pneg %p294
        %p587 = pneg %p318
        %p588 = pneg %p315
        %p589 = pneg %p339
        %p590 = pneg %p336
        %p591 = pneg %p360
        %p592 = pneg %p357
        %p593 = pneg %p381
        %p594 = pneg %p378
        %p595 = pneg %p402
        %p596 = pneg %p399
        %p597 = pneg %p430
        %p598 = pneg %p427
        %s599 = sand.u32 %s417, 1
        %s600 = scalar_lea.sflag [#allocation7], %s599
        %s601 = sand.u32 %s417, 1
        %s602 = smul.addr %s601, 8
        %s603 = scalar_lea.vmem [#allocation11], %s602
        %p604 = scmp.lt.s32.totalorder %s37, 1
        %s605 = scalar_select %p604, %s37, 1
        %s606 = smul.addr %s605, 8
        %s607 = scalar_lea.vmem %s0, %s606
        %p609 = scmp.eq.s32.totalorder %s38, 0
        // Predicated region
        $region101: #{tpu_custom_call.1} parent=87 // pred_check
          %p610 = pneg %p609
        $region102: #{tpu_custom_call.1} parent=87 // pred_check_branch
          %612 = sbr.rel (%p610) target = $region104
        $region103: #{tpu_custom_call.1} parent=87 // pred_region
          %v613 = vld [vmem:[%s607] sm:$0xff]
          %v614 = vpack.c.bf16 %v613, %v613
          %v615 = vld [vmem:[%s3] sm:$0xf]
          %v616 = vld [vmem:[%s3 + $0x4] sm:$0xf]
          %v617 = vld [vmem:[%s3 + $0x8] sm:$0xf]
          %v618 = vld [vmem:[%s3 + $0xc] sm:$0xf]
          %v619 = vld [vmem:[%s4] sm:$0x1]
          %v621 = vperm.slane %v619, 0
          %v627 = vunpack.c.l.b16 %v615
          %v628 = vunpack.c.l.b16 %v616
          %v629 = vunpack.c.l.b16 %v617
          %v630 = vunpack.c.l.b16 %v618
          %v631 = vpack.c.b16 %v628, %v627
          %v632 = vpack.c.b16 %v630, %v629
          %vm635 = vcmask 261120
          %v637 = vsel %vm635, %v614, 0
          %639 = vmatpush.bf16.msra.mxu0 0
          %640 = vmatpush.bf16.msra.mxu0 0
          %641 = vmatpush.bf16.msra.mxu0 0
          %642 = vmatpush.bf16.msra.mxu0 0
          %643 = vmatpush.bf16.msra.mxu0 0
          %644 = vmatpush.bf16.msra.mxu0 0
          %645 = vmatpush.bf16.msra.mxu0 %v632
          %646 = vmatpush.bf16.msra.mxu0 %v631
          %647 = vmatmul.bf16.gmra.mxu0 %v637
          %v648 = vpop.f32.mrf.mxu0
          %v649 = vadd.f32 %v621, %v648
          %v650 = vpop.f32.mrf.mxu0
          %651 = vdwg.mxu0
          %v652 = vpack.c.bf16 %v649, %v649
          %vm653 = vcmask 257024
          %654 = vst.msk [vmem:[#allocation2] sm:$0xf] %vm653, %v652
          %v655 = vld [vmem:[#allocation5] sm:$0xf]
          %v656 = vld [vmem:[#allocation5 + $0x4] sm:$0xf]
          %v657 = vld [vmem:[#allocation5 + $0x8] sm:$0xf]
          %v658 = vld [vmem:[#allocation5 + $0xc] sm:$0xf]
          %v659 = vld [vmem:[%s6] sm:$0x1]
          %v661 = vperm.slane %v659, 0
          %v667 = vunpack.c.l.b16 %v655
          %v668 = vunpack.c.l.b16 %v656
          %v669 = vunpack.c.l.b16 %v657
          %v670 = vunpack.c.l.b16 %v658
          %v671 = vpack.c.b16 %v668, %v667
          %v672 = vpack.c.b16 %v670, %v669
          %675 = vmatpush.bf16.msra.mxu0 0
          %676 = vmatpush.bf16.msra.mxu0 0
          %677 = vmatpush.bf16.msra.mxu0 0
          %678 = vmatpush.bf16.msra.mxu0 0
          %679 = vmatpush.bf16.msra.mxu0 0
          %680 = vmatpush.bf16.msra.mxu0 0
          %681 = vmatpush.bf16.msra.mxu0 %v672
          %682 = vmatpush.bf16.msra.mxu0 %v671
          %683 = vmatmul.bf16.gmra.mxu0 %v637
          %v684 = vpop.f32.mrf.mxu0
          %v685 = vadd.f32 %v661, %v684
          %v686 = vpop.f32.mrf.mxu0
          %687 = vdwg.mxu0
          %v688 = vpack.c.bf16 %v685, %v685
          %689 = vst.msk [vmem:[#allocation3] sm:$0xf] %vm653, %v688
        $region104: #{tpu_custom_call.1} parent=87 // pred_fallthru
          _
        %s690 = smul.u32 %s38, 8
        %s691 = scalar_lea.vmem %s607, %s690
        %v692 = vld [vmem:[%s691] sm:$0xff]
        %v693 = vpack.c.bf16 %v692, %v692
        %v694 = vld [vmem:[%s1] sm:$0xf]
        %v695 = vld [vmem:[%s1 + $0x4] sm:$0xf]
        %v696 = vld [vmem:[%s1 + $0x8] sm:$0xf]
        %v697 = vld [vmem:[%s1 + $0xc] sm:$0xf]
        %v698 = vld [vmem:[%s2] sm:$0x1]
        %v700 = vperm.slane %v698, 0
        %v706 = vunpack.c.l.b16 %v694
        %v707 = vunpack.c.l.b16 %v695
        %v708 = vunpack.c.l.b16 %v696
        %v709 = vunpack.c.l.b16 %v697
        %v710 = vpack.c.b16 %v707, %v706
        %v711 = vpack.c.b16 %v709, %v708
        %vm714 = vcmask 261120
        %v716 = vsel %vm714, %v693, 0
        %718 = vmatpush.bf16.msra.mxu0 0
        %719 = vmatpush.bf16.msra.mxu0 0
        %720 = vmatpush.bf16.msra.mxu0 0
        %721 = vmatpush.bf16.msra.mxu0 0
        %722 = vmatpush.bf16.msra.mxu0 0
        %723 = vmatpush.bf16.msra.mxu0 0
        %724 = vmatpush.bf16.msra.mxu0 %v711
        %725 = vmatpush.bf16.msra.mxu0 %v710
        %726 = vmatmul.bf16.gmra.mxu0 %v716
        %v727 = vpop.f32.mrf.mxu0
        %v728 = vadd.f32 %v700, %v727
        %v729 = vpop.f32.mrf.mxu0
        %730 = vdwg.mxu0
        %v731 = vpack.c.bf16 %v728, %v728
        %v732 = vld [vmem:[#allocation2] sm:$0xf]
        %v733 = vld [vmem:[#allocation3] sm:$0xf]
        %vm734 = vcmask 64512
        %v736 = vsel %vm734, %v731, 0
        %v739 = vsel %vm734, %v732, 0
        %741 = vmatpush.bf16.xpose.msra.mxu0 0
        %742 = vmatpush.bf16.xpose.msra.mxu0 0
        %743 = vmatpush.bf16.xpose.msra.mxu0 0
        %744 = vmatpush.bf16.xpose.msra.mxu0 0
        %745 = vmatpush.bf16.xpose.msra.mxu0 0
        %746 = vmatpush.bf16.xpose.msra.mxu0 0
        %747 = vmatpush.bf16.xpose.msra.mxu0 0
        %748 = vmatpush.bf16.xpose.msra.mxu0 %v739
        %749 = vmatmul.bf16.gmra.mxu0 %v736
        %v750 = vpop.f32.mrf.mxu0
        %v751 = vadd.f32 0.0, %v750
        %v752 = vpop.f32.mrf.mxu0
        %753 = vdwg.mxu0
        %v754 = vsel %vm734, %v751, -inf
        %755 = vmax.xlane.f32.xlu0 %v754
        %v756 = vpop.xlane.xlu0 %755
        %v757 = vsub.f32 %v751, %v756
        %v758 = vmul.f32 %v757, 1.442695
        %v759 = vpow.pop %v758
        %v760 = vsel %vm734, %v759, 0.0
        %761 = vadd.xlane.f32.xlu0 %v760
        %v762 = vpop.xlane.xlu0 %761
        %v763 = vrcp.pop %v762
        %v764 = vpack.c.bf16 %v759, %v759
        %v766 = vsel %vm734, %v764, 0
        %vm768 = vcmask 1043456
        %v770 = vsel %vm768, %v733, 0
        %772 = vmatpush.bf16.msra.mxu0 0
        %773 = vmatpush.bf16.msra.mxu0 0
        %774 = vmatpush.bf16.msra.mxu0 0
        %775 = vmatpush.bf16.msra.mxu0 0
        %776 = vmatpush.bf16.msra.mxu0 0
        %777 = vmatpush.bf16.msra.mxu0 0
        %778 = vmatpush.bf16.msra.mxu0 0
        %779 = vmatpush.bf16.msra.mxu0 %v770
        %780 = vmatmul.bf16.gmra.mxu0 %v766
        %v781 = vpop.f32.mrf.mxu0
        %v782 = vadd.f32 0.0, %v781
        %v783 = vpop.f32.mrf.mxu0
        %784 = vdwg.mxu0
        %v785 = vmul.f32 %v782, %v763
        %v786 = vpack.c.bf16 %v785, %v785
        %vm787 = vcmask 60416
        %788 = vst.msk [vmem:[#allocation4] sm:$0xf] %vm787, %v786
        %v790 = vunpack.c.l.b16 %v731
        %v791 = vpack.c.b16 %v790, %v790
        %792 = vrot.lane.b32.xlu0 %v791, 120
        %v793 = vpop.permute.xlu0 %792
        %v795 = vunpack.c.l.b16 %v732
        %v796 = vpack.c.b16 %v795, %v795
        %797 = vrot.lane.b32.xlu0 %v796, 120
        %v798 = vpop.permute.xlu0 %797
        %v800 = vsel %vm734, %v793, 0
        %v803 = vsel %vm734, %v798, 0
        %805 = vmatpush.bf16.xpose.msra.mxu0 0
        %806 = vmatpush.bf16.xpose.msra.mxu0 0
        %807 = vmatpush.bf16.xpose.msra.mxu0 0
        %808 = vmatpush.bf16.xpose.msra.mxu0 0
        %809 = vmatpush.bf16.xpose.msra.mxu0 0
        %810 = vmatpush.bf16.xpose.msra.mxu0 0
        %811 = vmatpush.bf16.xpose.msra.mxu0 0
        %812 = vmatpush.bf16.xpose.msra.mxu0 %v803
        %813 = vmatmul.bf16.gmra.mxu0 %v800
        %v814 = vpop.f32.mrf.mxu0
        %v815 = vadd.f32 0.0, %v814
        %v816 = vpop.f32.mrf.mxu0
        %817 = vdwg.mxu0
        %v818 = vsel %vm734, %v815, -inf
        %819 = vmax.xlane.f32.xlu0 %v818
        %v820 = vpop.xlane.xlu0 %819
        %v821 = vsub.f32 %v815, %v820
        %v822 = vmul.f32 %v821, 1.442695
        %v823 = vpow.pop %v822
        %v824 = vsel %vm734, %v823, 0.0
        %825 = vadd.xlane.f32.xlu0 %v824
        %v826 = vpop.xlane.xlu0 %825
        %v827 = vrcp.pop %v826
        %v828 = vpack.c.bf16 %v823, %v823
        %v830 = vunpack.c.l.b16 %v733
        %v831 = vpack.c.b16 %v830, %v830
        %832 = vrot.lane.b32.xlu0 %v831, 120
        %v833 = vpop.permute.xlu0 %832
        %v835 = vsel %vm734, %v828, 0
        %v838 = vsel %vm768, %v833, 0
        %840 = vmatpush.bf16.msra.mxu0 0
        %841 = vmatpush.bf16.msra.mxu0 0
        %842 = vmatpush.bf16.msra.mxu0 0
        %843 = vmatpush.bf16.msra.mxu0 0
        %844 = vmatpush.bf16.msra.mxu0 0
        %845 = vmatpush.bf16.msra.mxu0 0
        %846 = vmatpush.bf16.msra.mxu0 0
        %847 = vmatpush.bf16.msra.mxu0 %v838
        %848 = vmatmul.bf16.gmra.mxu0 %v835
        %v849 = vpop.f32.mrf.mxu0
        %v850 = vadd.f32 0.0, %v849
        %v851 = vpop.f32.mrf.mxu0
        %852 = vdwg.mxu0
        %v853 = vmul.f32 %v850, %v827
        %v854 = vpack.c.bf16 %v853, %v853
        %856 = vrot.lane.b32.xlu0 %v854, 8
        %v857 = vpop.permute.xlu0 %856
        %vm859 = vcmask 126016
        %860 = vst.msk [vmem:[#allocation4] sm:$0xf] %vm859, %v857
        %861 = vrot.lane.b32.xlu0 %v791, 112
        %v862 = vpop.permute.xlu0 %861
        %863 = vrot.lane.b32.xlu0 %v796, 112
        %v864 = vpop.permute.xlu0 %863
        %v866 = vsel %vm734, %v862, 0
        %v869 = vsel %vm734, %v864, 0
        %871 = vmatpush.bf16.xpose.msra.mxu0 0
        %872 = vmatpush.bf16.xpose.msra.mxu0 0
        %873 = vmatpush.bf16.xpose.msra.mxu0 0
        %874 = vmatpush.bf16.xpose.msra.mxu0 0
        %875 = vmatpush.bf16.xpose.msra.mxu0 0
        %876 = vmatpush.bf16.xpose.msra.mxu0 0
        %877 = vmatpush.bf16.xpose.msra.mxu0 0
        %878 = vmatpush.bf16.xpose.msra.mxu0 %v869
        %879 = vmatmul.bf16.gmra.mxu0 %v866
        %v880 = vpop.f32.mrf.mxu0
        %v881 = vadd.f32 0.0, %v880
        %v882 = vpop.f32.mrf.mxu0
        %883 = vdwg.mxu0
        %v884 = vsel %vm734, %v881, -inf
        %885 = vmax.xlane.f32.xlu0 %v884
        %v886 = vpop.xlane.xlu0 %885
        %v887 = vsub.f32 %v881, %v886
        %v888 = vmul.f32 %v887, 1.442695
        %v889 = vpow.pop %v888
        %v890 = vsel %vm734, %v889, 0.0
        %891 = vadd.xlane.f32.xlu0 %v890
        %v892 = vpop.xlane.xlu0 %891
        %v893 = vrcp.pop %v892
        %v894 = vpack.c.bf16 %v889, %v889
        %895 = vrot.lane.b32.xlu0 %v831, 112
        %v896 = vpop.permute.xlu0 %895
        %v898 = vsel %vm734, %v894, 0
        %v901 = vsel %vm768, %v896, 0
        %903 = vmatpush.bf16.msra.mxu0 0
        %904 = vmatpush.bf16.msra.mxu0 0
        %905 = vmatpush.bf16.msra.mxu0 0
        %906 = vmatpush.bf16.msra.mxu0 0
        %907 = vmatpush.bf16.msra.mxu0 0
        %908 = vmatpush.bf16.msra.mxu0 0
        %909 = vmatpush.bf16.msra.mxu0 0
        %910 = vmatpush.bf16.msra.mxu0 %v901
        %911 = vmatmul.bf16.gmra.mxu0 %v898
        %v912 = vpop.f32.mrf.mxu0
        %v913 = vadd.f32 0.0, %v912
        %v914 = vpop.f32.mrf.mxu0
        %915 = vdwg.mxu0
        %v916 = vmul.f32 %v913, %v893
        %v917 = vpack.c.bf16 %v916, %v916
        %919 = vrot.lane.b32.xlu0 %v917, 16
        %v920 = vpop.permute.xlu0 %919
        %vm922 = vcmask 191616
        %923 = vst.msk [vmem:[#allocation4] sm:$0xf] %vm922, %v920
        %924 = vrot.lane.b32.xlu0 %v791, 104
        %v925 = vpop.permute.xlu0 %924
        %926 = vrot.lane.b32.xlu0 %v796, 104
        %v927 = vpop.permute.xlu0 %926
        %v929 = vsel %vm734, %v925, 0
        %v932 = vsel %vm734, %v927, 0
        %934 = vmatpush.bf16.xpose.msra.mxu0 0
        %935 = vmatpush.bf16.xpose.msra.mxu0 0
        %936 = vmatpush.bf16.xpose.msra.mxu0 0
        %937 = vmatpush.bf16.xpose.msra.mxu0 0
        %938 = vmatpush.bf16.xpose.msra.mxu0 0
        %939 = vmatpush.bf16.xpose.msra.mxu0 0
        %940 = vmatpush.bf16.xpose.msra.mxu0 0
        %941 = vmatpush.bf16.xpose.msra.mxu0 %v932
        %942 = vmatmul.bf16.gmra.mxu0 %v929
        %v943 = vpop.f32.mrf.mxu0
        %v944 = vadd.f32 0.0, %v943
        %v945 = vpop.f32.mrf.mxu0
        %946 = vdwg.mxu0
        %v947 = vsel %vm734, %v944, -inf
        %948 = vmax.xlane.f32.xlu0 %v947
        %v949 = vpop.xlane.xlu0 %948
        %v950 = vsub.f32 %v944, %v949
        %v951 = vmul.f32 %v950, 1.442695
        %v952 = vpow.pop %v951
        %v953 = vsel %vm734, %v952, 0.0
        %954 = vadd.xlane.f32.xlu0 %v953
        %v955 = vpop.xlane.xlu0 %954
        %v956 = vrcp.pop %v955
        %v957 = vpack.c.bf16 %v952, %v952
        %958 = vrot.lane.b32.xlu0 %v831, 104
        %v959 = vpop.permute.xlu0 %958
        %v961 = vsel %vm734, %v957, 0
        %v964 = vsel %vm768, %v959, 0
        %966 = vmatpush.bf16.msra.mxu0 0
        %967 = vmatpush.bf16.msra.mxu0 0
        %968 = vmatpush.bf16.msra.mxu0 0
        %969 = vmatpush.bf16.msra.mxu0 0
        %970 = vmatpush.bf16.msra.mxu0 0
        %971 = vmatpush.bf16.msra.mxu0 0
        %972 = vmatpush.bf16.msra.mxu0 0
        %973 = vmatpush.bf16.msra.mxu0 %v964
        %974 = vmatmul.bf16.gmra.mxu0 %v961
        %v975 = vpop.f32.mrf.mxu0
        %v976 = vadd.f32 0.0, %v975
        %v977 = vpop.f32.mrf.mxu0
        %978 = vdwg.mxu0
        %v979 = vmul.f32 %v976, %v956
        %v980 = vpack.c.bf16 %v979, %v979
        %982 = vrot.lane.b32.xlu0 %v980, 24
        %v983 = vpop.permute.xlu0 %982
        %vm985 = vcmask 257216
        %986 = vst.msk [vmem:[#allocation4] sm:$0xf] %vm985, %v983
        %v987 = vld [vmem:[#allocation4] sm:$0xf]
        %v988 = vld [vmem:[#allocation8] sm:$0xf]
        %v989 = vld [vmem:[#allocation8 + $0x4] sm:$0xf]
        %v990 = vld [vmem:[#allocation8 + $0x8] sm:$0xf]
        %v991 = vld [vmem:[#allocation8 + $0xc] sm:$0xf]
        %v992 = vld [vmem:[%s8] sm:$0x1]
        %v994 = vperm.slane %v992, 0
        %v1000 = vunpack.c.l.b16 %v988
        %v1001 = vunpack.c.l.b16 %v989
        %v1002 = vunpack.c.l.b16 %v990
        %v1003 = vunpack.c.l.b16 %v991
        %v1004 = vpack.c.b16 %v1001, %v1000
        %v1005 = vpack.c.b16 %v1003, %v1002
        %v1009 = vsel %vm714, %v987, 0
        %1011 = vmatpush.bf16.msra.mxu0 0
        %1012 = vmatpush.bf16.msra.mxu0 0
        %1013 = vmatpush.bf16.msra.mxu0 0
        %1014 = vmatpush.bf16.msra.mxu0 0
        %1015 = vmatpush.bf16.msra.mxu0 0
        %1016 = vmatpush.bf16.msra.mxu0 0
        %1017 = vmatpush.bf16.msra.mxu0 %v1005
        %1018 = vmatpush.bf16.msra.mxu0 %v1004
        %1019 = vmatmul.bf16.gmra.mxu0 %v1009
        %v1020 = vpop.f32.mrf.mxu0
        %v1021 = vadd.f32 %v994, %v1020
        %v1022 = vpop.f32.mrf.mxu0
        %1023 = vdwg.mxu0
        %v1024 = vadd.f32 %v692, %v1021
        %v1025 = vsel %vm714, %v1024, 0.0
        %1026 = vadd.xlane.f32.xlu0 %v1025
        %v1027 = vpop.xlane.xlu0 %1026
        %v1028 = vrcp.pop 32.0
        %v1029 = vmul.f32 32.0, %v1028
        %v1030 = vsub.f32 1.0, %v1029
        %v1031 = vmul.f32 %v1028, %v1030
        %v1032 = vadd.f32 %v1028, %v1031
        %vm1033 = vweird.f32 %v1028
        %v1034 = vsel %vm1033, %v1028, %v1032
        %v1035 = vmul.f32 %v1027, %v1034
        %v1036 = vsub.f32 %v1024, %v1035
        %v1037 = vmul.f32 %v1036, %v1036
        %v1038 = vsel %vm714, %v1037, 0.0
        %1039 = vadd.xlane.f32.xlu0 %v1038
        %v1040 = vpop.xlane.xlu0 %1039
        %v1041 = vmul.f32 %v1040, %v1034
        %v1042 = vadd.f32 %v1041, 1e-05
        %v1043 = vrsqrt.pop %v1042
        %v1044 = vmul.f32 %v1043, %v1042
        %v1045 = vmul.f32 %v1044, %v1043
        %v1046 = vmul.f32 0.5, %v1045
        %v1047 = vsub.f32 1.5, %v1046
        %v1048 = vmul.f32 %v1043, %v1047
        %vm1049 = vweird.f32 %v1042
        %vm1050 = vweird.f32 %v1043
        %vm1051 = vmor %vm1049, %vm1050
        %v1052 = vsel %vm1051, %v1043, %v1048
        %v1053 = vmul.f32 %v1036, %v1052
        %v1054 = vld [vmem:[%s13] sm:$0x1]
        %v1056 = vperm.slane %v1054, 0
        %v1058 = vmul.f32 %v1053, %v1056
        %v1059 = vld [vmem:[%s14] sm:$0x1]
        %v1061 = vperm.slane %v1059, 0
        %v1063 = vadd.f32 %v1058, %v1061
        %v1064 = vpack.c.bf16 %v1063, %v1063
        %v1065 = vld [vmem:[#allocation10] sm:$0xf]
        %v1066 = vld [vmem:[#allocation10 + $0x4] sm:$0xf]
        %v1067 = vld [vmem:[#allocation10 + $0x8] sm:$0xf]
        %v1068 = vld [vmem:[#allocation10 + $0xc] sm:$0xf]
        %v1069 = vld [vmem:[%s10] sm:$0x1]
        %v1071 = vperm.slane %v1069, 0
        %v1077 = vunpack.c.l.b16 %v1065
        %v1078 = vunpack.c.l.b16 %v1066
        %v1079 = vunpack.c.l.b16 %v1067
        %v1080 = vunpack.c.l.b16 %v1068
        %v1081 = vpack.c.b16 %v1078, %v1077
        %v1082 = vpack.c.b16 %v1080, %v1079
        %v1086 = vsel %vm714, %v1064, 0
        %1088 = vmatpush.bf16.msra.mxu0 0
        %1089 = vmatpush.bf16.msra.mxu0 0
        %1090 = vmatpush.bf16.msra.mxu0 0
        %1091 = vmatpush.bf16.msra.mxu0 0
        %1092 = vmatpush.bf16.msra.mxu0 0
        %1093 = vmatpush.bf16.msra.mxu0 0
        %1094 = vmatpush.bf16.msra.mxu0 %v1082
        %1095 = vmatpush.bf16.msra.mxu0 %v1081
        %1096 = vmatmul.bf16.gmra.mxu0 %v1086
        %v1097 = vpop.f32.mrf.mxu0
        %v1098 = vadd.f32 %v1071, %v1097
        %v1099 = vpop.f32.mrf.mxu0
        %1100 = vdwg.mxu0
        %v1101 = vmax.f32 %v1098, 0.0
        %v1102 = vpack.c.bf16 %v1101, %v1101
        %v1103 = vld [vmem:[%s11] sm:$0xf]
        %v1104 = vld [vmem:[%s11 + $0x4] sm:$0xf]
        %v1105 = vld [vmem:[%s11 + $0x8] sm:$0xf]
        %v1106 = vld [vmem:[%s11 + $0xc] sm:$0xf]
        %v1107 = vld [vmem:[%s11 + $0x10] sm:$0xf]
        %v1108 = vld [vmem:[%s11 + $0x14] sm:$0xf]
        %v1109 = vld [vmem:[%s11 + $0x18] sm:$0xf]
        %v1110 = vld [vmem:[%s11 + $0x1c] sm:$0xf]
        %v1111 = vld [vmem:[%s12] sm:$0x1]
        %v1113 = vperm.slane %v1111, 0
        %v1123 = vunpack.c.l.b16 %v1103
        %v1124 = vunpack.c.l.b16 %v1104
        %v1125 = vunpack.c.l.b16 %v1105
        %v1126 = vunpack.c.l.b16 %v1106
        %v1127 = vunpack.c.l.b16 %v1107
        %v1128 = vunpack.c.l.b16 %v1108
        %v1129 = vunpack.c.l.b16 %v1109
        %v1130 = vunpack.c.l.b16 %v1110
        %v1131 = vpack.c.b16 %v1124, %v1123
        %v1132 = vpack.c.b16 %v1126, %v1125
        %v1133 = vpack.c.b16 %v1128, %v1127
        %v1134 = vpack.c.b16 %v1130, %v1129
        %vm1139 = vcmask 523264
        %v1141 = vsel %vm1139, %v1102, 0
        %1143 = vmatpush.bf16.msra.mxu0 0
        %1144 = vmatpush.bf16.msra.mxu0 0
        %1145 = vmatpush.bf16.msra.mxu0 0
        %1146 = vmatpush.bf16.msra.mxu0 0
        %1147 = vmatpush.bf16.msra.mxu0 %v1134
        %1148 = vmatpush.bf16.msra.mxu0 %v1133
        %1149 = vmatpush.bf16.msra.mxu0 %v1132
        %1150 = vmatpush.bf16.msra.mxu0 %v1131
        %1151 = vmatmul.bf16.gmra.mxu0 %v1141
        %v1152 = vpop.f32.mrf.mxu0
        %v1153 = vadd.f32 %v1113, %v1152
        %v1154 = vpop.f32.mrf.mxu0
        %1155 = vdwg.mxu0
        %v1156 = vadd.f32 %v1063, %v1153
        %v1157 = vsel %vm714, %v1156, 0.0
        %1158 = vadd.xlane.f32.xlu0 %v1157
        %v1159 = vpop.xlane.xlu0 %1158
        %v1160 = vmul.f32 %v1159, %v1034
        %v1161 = vsub.f32 %v1156, %v1160
        %v1162 = vmul.f32 %v1161, %v1161
        %v1163 = vsel %vm714, %v1162, 0.0
        %1164 = vadd.xlane.f32.xlu0 %v1163
        %v1165 = vpop.xlane.xlu0 %1164
        %v1166 = vmul.f32 %v1165, %v1034
        %v1167 = vadd.f32 %v1166, 1e-05
        %v1168 = vrsqrt.pop %v1167
        %v1169 = vmul.f32 %v1168, %v1167
        %v1170 = vmul.f32 %v1169, %v1168
        %v1171 = vmul.f32 0.5, %v1170
        %v1172 = vsub.f32 1.5, %v1171
        %v1173 = vmul.f32 %v1168, %v1172
        %vm1174 = vweird.f32 %v1167
        %vm1175 = vweird.f32 %v1168
        %vm1176 = vmor %vm1174, %vm1175
        %v1177 = vsel %vm1176, %v1168, %v1173
        %v1178 = vmul.f32 %v1161, %v1177
        %v1179 = vld [vmem:[%s15] sm:$0x1]
        %v1181 = vperm.slane %v1179, 0
        %v1183 = vmul.f32 %v1178, %v1181
        %v1184 = vld [vmem:[%s16] sm:$0x1]
        %v1186 = vperm.slane %v1184, 0
        %v1188 = vadd.f32 %v1183, %v1186
        %1189 = vst.msk [vmem:[%s603] sm:$0xff] %vm714, %v1188
        %s1190 = sand.u32 %s417, 1
        %s1191 = scalar_lea.sflag [#allocation7], %s1190
        %s1192 = sand.u32 %s417, 1
        %s1193 = smul.addr %s1192, 8
        %s1194 = scalar_lea.vmem [#allocation11], %s1193
        // Predicated region
        $region105: #{tpu_custom_call.1} parent=87 // pred_check
          %p1195 = pneg %p427
        $region106: #{tpu_custom_call.1} parent=87 // pred_check_branch
          %1197 = sbr.rel (%p1195) target = $region108
        $region107: #{tpu_custom_call.1} parent=87 // pred_region
          %1199 = vsyncadd %s1191, 0
          %s1200 = sadd.s32 %s38, %s37
          %s1201 = smul.addr %s1200, 8
          %s1202 = scalar_lea.hbm %s17, %s1201
          %s1204 = sshll.u32 %s1194, 4
          %s1205 = int_to_ptr.vmem [resolvable:$true] %s1204
          %s1206 = sshll.u32 %s1202, 4
          %s1207 = int_to_ptr.hbm [resolvable:$true] %s1206
          %1209 = dma.vmem_to_hbm [thread:$0]  %s1205, 128, %s1207, %s1191
        $region108: #{tpu_custom_call.1} parent=87 // pred_fallthru
          _
      $region88: #{tpu_custom_call.1} parent=5 // pred_fallthru
        _
      %p1210 = scmp.le.s32.totalorder 2, %s28
      // Predicated region
      $region109: #{tpu_custom_call.1} parent=5 // pred_check
        %p1211 = pneg %p1210
      $region110: #{tpu_custom_call.1} parent=5 // pred_check_branch
        %1213 = sbr.rel (%p1211) target = $region112
      $region111: #{tpu_custom_call.1} parent=5 // pred_region
        %s1214 = ssub.s32 %s28, 2
        // Predicated region
        $region113: #{tpu_custom_call.1} parent=111 // pred_check
          %p1215 = pneg %p433
        $region114: #{tpu_custom_call.1} parent=111 // pred_check_branch
          %1217 = sbr.rel (%p1215) target = $region116
        $region115: #{tpu_custom_call.1} parent=111 // pred_region
          %s1218 = sand.u32 %s418, 1
          %s1219 = scalar_lea.sflag [#allocation7], %s1218
          %s1220 = sand.u32 %s418, 1
          %s1221 = smul.addr %s1220, 8
          %s1222 = scalar_lea.vmem [#allocation11], %s1221
          %1224 = dma.done %s1219, 128
        $region116: #{tpu_custom_call.1} parent=111 // pred_fallthru
          _
      $region112: #{tpu_custom_call.1} parent=5 // pred_fallthru
        _
    $region6: #{tpu_custom_call.1} parent=1 // loop_footer
      %s32 = sadd.s32 1, %s28
    $region7: #{tpu_custom_call.1} parent=1 // loop_footer_branch
      %27 = sbr.rel target = $region3
    $region8: #{tpu_custom_call.1} parent=1 // loop_exit
      _
    %1225 = vsyncpa [#allocation6], 1
    %s1226 = scalar_lea.sflag [#allocation6], 1
    %1227 = vsyncpa %s1226, 1
    %1228 = vsyncpa [#allocation9], 1
    %1229 = vsyncpa [#allocation7], 1
    %s1230 = scalar_lea.sflag [#allocation7], 1
    %1231 = vsyncpa %s1230, 1

</llo_original>
